<compile_context>
chip_gen: v7x
topology: tpu7x:2x2x1
jax: 0.10.0
libtpu: 0.0.40
codegen_flags: <defaults>
</compile_context>

<pallas_src>
import functools

import jax
import jax.numpy as jnp
from jax.experimental import pallas as pl
from jax.experimental.pallas import tpu as pltpu

SELU_ALPHA = 1.6732632423543772
SELU_SCALE = 1.0507009873554805

_LANE = 128


def _round_up(x, m):
    return (x + m - 1) // m * m


def _selu(x):
    return SELU_SCALE * jnp.where(x > 0, x, SELU_ALPHA * (jnp.exp(x) - 1.0))


def _softmax_kernel(x, axis):
    z = x - jnp.max(x, axis=axis, keepdims=True)
    e = jnp.exp(z)
    # EUP approximate reciprocal instead of a VALU divide (free slot).
    return e * pl.reciprocal(jnp.sum(e, axis=axis, keepdims=True), approx=True)


# ----------------------------------------------------------------------------
# Fused decoder-step kernel: embedding gather + global-embedding gate + LSTM
# cell + luong_gate attention + vocab projection.  Single grid point; all
# operands live in VMEM.
# ----------------------------------------------------------------------------
def _decoder_kernel(ids_ref, prev_ref, h0_ref, c0_ref, embw_ref, w_ref, ctx_ref,
                    logits_ref, h1_ref, c1_ref, attn_ref, *, tau, E, H, V, T):
    f32 = jnp.float32
    L = _LANE
    dot = lambda a, b: jnp.dot(a, b, preferred_element_type=f32)

    # ---- weight slab carve-out (static slices; bf16 -> f32 upcast in-kernel).
    # Layout (built once by pack_decoder_params); all stored transposed [in,out]:
    #   rows [0,E)        lanes [0,E):   g1w.T     lanes [L,L+4H): wih.T[:E]
    #   rows [E,2E)       lanes [0,E):   g2w.T     lanes [L,L+4H): wih.T[E:]
    #   rows [2E,2E+H)    lanes [0,4H):  whh.T     lanes [L,L+H):  ain2.T
    #   rows [2E+H,+H)    lanes [0,H):   ain1.T    lanes [L,L+H):  aout1.T[H:]
    #   rows [2E+2H,+H)   lanes [0,H):   aout1.T[:H] lanes [L,L+H): aout2.T
    #   rows [2E+3H,+H)   lanes [0,V):   lin.T
    #   rows [2E+4H,+8)   bias rows (pre-summed where applicable)
    def wblk(r0, rows, c0, cols):
        return w_ref[r0:r0 + rows, c0:c0 + cols].astype(f32)

    emb_lhs = wblk(0, E, 0, 2 * L)              # [g1w | pad | wih_a]  (LHS embs)
    g2w = wblk(E, E, 0, E)                      #                      (LHS emb_avg)
    wih_b = wblk(E, E, L, 4 * H)                #                      (LHS emb_glb)
    r = 2 * E
    whh = wblk(r, H, 0, 4 * H)                  #                      (LHS h0)
    ain2 = wblk(r, H, L, H)                     #                      (LHS t1)
    r = 2 * E + H
    h1_lhs = wblk(r, H, 0, 2 * L)               # [ain1 | pad | aout1_h] (LHS h1)
    r = 2 * E + 2 * H
    aout1_c = wblk(r, H, 0, H)                  #                      (LHS c_t)
    aout2 = wblk(r, H, L, H)                    #                      (LHS u)
    r = 2 * E + 3 * H
    lin = wblk(r, H, 0, V)                      # vocab projection     (LHS att_out)
    bias = wblk(2 * E + 4 * H, 8, 0, w_ref.shape[1])
    gate_b = bias[0:1, 0:E]        # g1b + g2b (pre-summed)
    lstm_b = bias[1:2, 0:4 * H]    # b_ih + b_hh (pre-summed)
    ain1_b = bias[2:3, 0:H]
    ain2_b = bias[3:4, 0:H]
    aout1_b = bias[4:5, 0:H]
    aout2_b = bias[5:6, 0:H]
    lin_b = bias[6:7, 0:V]

    # ---- activations ---------------------------------------------------------
    ids = ids_ref[...]                                   # [B, 1] int32 token ids
    prev = prev_ref[...].astype(f32)                     # [B, V] previous logits
    h0 = h0_ref[0].astype(f32)                           # [B, H]
    c0 = c0_ref[0].astype(f32)                           # [B, H]
    emb_w = embw_ref[...].astype(f32)                    # [V, E]
    ctx = ctx_ref[...].astype(f32)                       # [B, T, H] encoder memory
    B = prev.shape[0]

    # ---- nn.Embedding gather folded in as a one-hot MXU dot ------------------
    onehot = (jax.lax.broadcasted_iota(jnp.int32, (B, V), 1) == ids).astype(f32)
    embs = dot(onehot, emb_w)                                             # [B, E]

    # ---- global_emb gating ---------------------------------------------------
    probs = _softmax_kernel(prev * (1.0 / tau), axis=1)                   # [B, V]
    emb_avg = dot(probs, emb_w)                                           # [B, E]
    e_fused = dot(embs, emb_lhs)              # gate preact | LSTM-ih (embs half)
    gate = jax.nn.sigmoid(e_fused[:, 0:E] + dot(emb_avg, g2w) + gate_b)
    emb_glb = gate * embs + (1.0 - gate) * emb_avg                        # [B, E]
    # concat([embs, emb_glb]) is folded into the LSTM matmul via split-K dots.

    # ---- StackedLSTM, num_layers=1; PyTorch LSTMCell gate order (i, f, g, o) -
    gates = (e_fused[:, L:L + 4 * H] + dot(emb_glb, wih_b) + dot(h0, whh)
             + lstm_b)
    i_g = jax.nn.sigmoid(gates[:, 0:H])
    f_g = jax.nn.sigmoid(gates[:, H:2 * H])
    g_g = jnp.tanh(gates[:, 2 * H:3 * H])
    o_g = jax.nn.sigmoid(gates[:, 3 * H:4 * H])
    c1 = f_g * c0 + i_g * g_g
    h1 = o_g * jnp.tanh(c1)

    # ---- luong_gate attention (eval mode: internal dropouts are identity) ----
    h_fused = dot(h1, h1_lhs)                 # ain1 preact | linear_out (h1 half)
    t1 = _selu(h_fused[:, 0:H] + ain1_b)
    gamma_h = _selu(dot(t1, ain2) + ain2_b)                               # [B, H]
    # Tiny [B,T,H] contraction: VPU mul + XLU reduce (a batched MXU dot with a
    # rank-2 result buys nothing at this size and adds lowering risk).
    scores = jnp.sum(ctx * gamma_h[:, None, :], axis=-1)                  # [B, T]
    weights = _softmax_kernel(scores, axis=-1)
    c_t = jnp.sum(weights[:, :, None] * ctx, axis=1)                      # [B, H]
    u = _selu(dot(c_t, aout1_c) + h_fused[:, L:L + H] + aout1_b)
    att_out = _selu(dot(u, aout2) + aout2_b)                              # [B, H]

    # ---- outputs: four plain full-view stores (no zero-fill, no sub-stores) --
    logits_ref[...] = dot(att_out, lin) + lin_b                           # [B, V]
    h1_ref[0] = h1
    c1_ref[0] = c1
    attn_ref[...] = weights


# ----------------------------------------------------------------------------
# One-time parameter packing: all small weights/biases -> a single bf16 slab,
# two 128-aligned fields per 256-lane row (cuts lane padding ~2x vs. one field
# per row, then bf16 halves bytes again).  PyTorch Linear weights are [out,in];
# we store transposed ([in, out]).
# ----------------------------------------------------------------------------
def pack_decoder_params(params, weight_dtype=jnp.bfloat16):
    emb_w = jnp.asarray(params["embedding"], jnp.float32)
    V, E = emb_w.shape
    H = params["whh"].shape[1]
    L = _LANE
    assert E % 8 == 0 and H % 8 == 0 and E <= L and 4 * H <= L
    LW = max(_round_up(V, L), 2 * L)
    n_rows = 2 * E + 4 * H + 8
    slab = jnp.zeros((n_rows, LW), jnp.float32)

    def put(s, x, r, c):
        x = jnp.asarray(x, jnp.float32)
        if x.ndim == 1:
            x = x.reshape(1, -1)
        return s.at[r:r + x.shape[0], c:c + x.shape[1]].set(x)

    wih_t = jnp.asarray(params["wih"], jnp.float32).T        # [2E, 4H]
    aout1_t = jnp.asarray(params["aout1w"], jnp.float32).T   # [2H, H]
    slab = put(slab, jnp.asarray(params["g1w"]).T, 0, 0)
    slab = put(slab, wih_t[:E], 0, L)
    slab = put(slab, jnp.asarray(params["g2w"]).T, E, 0)
    slab = put(slab, wih_t[E:], E, L)
    r = 2 * E
    slab = put(slab, jnp.asarray(params["whh"]).T, r, 0)
    slab = put(slab, jnp.asarray(params["ain2w"]).T, r, L)
    r = 2 * E + H
    slab = put(slab, jnp.asarray(params["ain1w"]).T, r, 0)
    slab = put(slab, aout1_t[H:], r, L)                      # linear_out (h1 half)
    r = 2 * E + 2 * H
    slab = put(slab, aout1_t[:H], r, 0)                      # linear_out (c_t half)
    slab = put(slab, jnp.asarray(params["aout2w"]).T, r, L)
    r = 2 * E + 3 * H
    slab = put(slab, jnp.asarray(params["linw"]).T, r, 0)
    rb = 2 * E + 4 * H
    slab = put(slab, jnp.asarray(params["g1b"]) + jnp.asarray(params["g2b"]), rb, 0)
    slab = put(slab, jnp.asarray(params["bih"]) + jnp.asarray(params["bhh"]), rb + 1, 0)
    slab = put(slab, params["ain1b"], rb + 2, 0)
    slab = put(slab, params["ain2b"], rb + 3, 0)
    slab = put(slab, params["aout1b"], rb + 4, 0)
    slab = put(slab, params["aout2b"], rb + 5, 0)
    slab = put(slab, params["linb"], rb + 6, 0)

    return {"emb_w": emb_w.astype(weight_dtype),
            "wslab": slab.astype(weight_dtype),
            "V": V, "E": E, "H": H}


# ----------------------------------------------------------------------------
# Wrapper: everything (including the embedding gather) runs inside one Pallas
# kernel; the wrapper only reshapes the token ids to a 2-D int operand.
# ----------------------------------------------------------------------------
def rnn_decoder_forward(packed, input_ids, state, context, prev_output=None,
                        tau=1.0):
    emb_w, wslab = packed["emb_w"], packed["wslab"]
    V, E, H = packed["V"], packed["E"], packed["H"]
    B = input_ids.shape[0]
    T = context.shape[1]
    h0, c0 = state                                    # each [num_layers=1, B, H]
    assert h0.shape[0] == 1 and c0.shape[0] == 1      # TODO(synk): num_layers > 1
    if prev_output is None:
        prev_output = jnp.zeros((B, V), jnp.float32)

    kernel = functools.partial(_decoder_kernel, tau=float(tau),
                               E=E, H=H, V=V, T=T)
    vmem = pl.BlockSpec(memory_space=pltpu.MemorySpace.VMEM)
    logits, h1, c1, attn = pl.pallas_call(
        kernel,
        out_shape=(jax.ShapeDtypeStruct((B, V), jnp.float32),
                   jax.ShapeDtypeStruct((1, B, H), jnp.float32),
                   jax.ShapeDtypeStruct((1, B, H), jnp.float32),
                   jax.ShapeDtypeStruct((B, T), jnp.float32)),
        in_specs=[vmem] * 7,
        out_specs=(vmem, vmem, vmem, vmem),
        compiler_params=pltpu.CompilerParams(vmem_limit_bytes=4 * 1024 * 1024),
    )(input_ids.astype(jnp.int32).reshape(B, 1),
      jnp.asarray(prev_output, jnp.float32),
      jnp.asarray(h0, jnp.float32),
      jnp.asarray(c0, jnp.float32),
      emb_w, wslab,
      jnp.asarray(context, jnp.float32))
    return logits, (h1, c1), attn


# ----------------------------------------------------------------------------
# Pure-JAX reference mirroring the PyTorch forward (eval mode) for validation.
# ----------------------------------------------------------------------------
def _selu_ref(x):
    return SELU_SCALE * jnp.where(x > 0, x, SELU_ALPHA * (jnp.exp(x) - 1.0))


def rnn_decoder_reference(params, input_ids, state, context, prev_output, tau):
    emb_w = params["embedding"]
    embs = jnp.take(emb_w, input_ids, axis=0)
    probs = jax.nn.softmax(prev_output / tau, axis=1)
    emb_avg = probs @ emb_w
    gate = jax.nn.sigmoid(embs @ params["g1w"].T + params["g1b"] +
                          emb_avg @ params["g2w"].T + params["g2b"])
    emb_glb = gate * embs + (1.0 - gate) * emb_avg
    x = jnp.concatenate([embs, emb_glb], axis=-1)
    h0, c0 = state[0][0], state[1][0]
    gates = x @ params["wih"].T + params["bih"] + h0 @ params["whh"].T + params["bhh"]
    H = h0.shape[-1]
    i = jax.nn.sigmoid(gates[:, :H])
    f = jax.nn.sigmoid(gates[:, H:2 * H])
    g = jnp.tanh(gates[:, 2 * H:3 * H])
    o = jax.nn.sigmoid(gates[:, 3 * H:])
    c1 = f * c0 + i * g
    h1 = o * jnp.tanh(c1)
    t1 = _selu_ref(h1 @ params["ain1w"].T + params["ain1b"])
    gamma_h = _selu_ref(t1 @ params["ain2w"].T + params["ain2b"])
    scores = jnp.einsum("bth,bh->bt", context, gamma_h)
    weights = jax.nn.softmax(scores, axis=-1)
    c_t = jnp.einsum("bt,bth->bh", weights, context)
    cat = jnp.concatenate([c_t, h1], axis=-1)
    u = _selu_ref(cat @ params["aout1w"].T + params["aout1b"])
    att_out = _selu_ref(u @ params["aout2w"].T + params["aout2b"])
    logits = att_out @ params["linw"].T + params["linb"]
    return logits, (h1[None], c1[None]), weights


if __name__ == "__main__":
    V, E, H, B, T, L = 256, 32, 32, 8, 16, 1
    key = jax.random.PRNGKey(0)
    keys = jax.random.split(key, 24)

    def nrm(k, shape, s=0.1):
        return (s * jax.random.normal(k, shape)).astype(jnp.float32)

    # Deterministic synthetic parameters (PyTorch layout: Linear weights [out, in]).
    params = {
        "embedding": nrm(keys[0], (V, E)),
        "g1w": nrm(keys[1], (E, E)), "g1b": nrm(keys[2], (1, E)),
        "g2w": nrm(keys[3], (E, E)), "g2b": nrm(keys[4], (1, E)),
        "wih": nrm(keys[5], (4 * H, 2 * E)), "whh": nrm(keys[6], (4 * H, H)),
        "bih": nrm(keys[7], (1, 4 * H)), "bhh": nrm(keys[8], (1, 4 * H)),
        "ain1w": nrm(keys[9], (H, H)), "ain1b": nrm(keys[10], (1, H)),
        "ain2w": nrm(keys[11], (H, H)), "ain2b": nrm(keys[12], (1, H)),
        "aout1w": nrm(keys[13], (H, 2 * H)), "aout1b": nrm(keys[14], (1, H)),
        "aout2w": nrm(keys[15], (H, H)), "aout2b": nrm(keys[16], (1, H)),
        "linw": nrm(keys[17], (V, H)), "linb": nrm(keys[18], (1, V)),
    }

    input_ids = jax.random.randint(keys[19], (B,), 0, V)        # token ids
    h0 = nrm(keys[20], (L, B, H), 1.0)                          # LSTM hidden state
    c0 = nrm(keys[21], (L, B, H), 1.0)                          # LSTM cell state
    context = nrm(keys[22], (B, T, H), 1.0)                     # encoder memory
    prev_output = nrm(keys[23], (B, V), 1.0)                    # previous logits
    tau = 1.0

    packed_params = pack_decoder_params(params)                 # build once (bf16)
    logits, (h1, c1), attn = rnn_decoder_forward(
        packed_params, input_ids, (h0, c0), context, prev_output, tau)
    jax.block_until_ready((logits, h1, c1, attn))

    ref_logits, (rh1, rc1), ref_attn = rnn_decoder_reference(
        params, input_ids, (h0, c0), context, prev_output, tau)

    assert logits.shape == (B, V) and attn.shape == (B, T)
    assert h1.shape == (L, B, H) and c1.shape == (L, B, H)
    assert jnp.allclose(logits, ref_logits, rtol=2e-2, atol=2e-3), "logits mismatch"
    assert jnp.allclose(h1, rh1, rtol=2e-2, atol=2e-3), "h state mismatch"
    assert jnp.allclose(c1, rc1, rtol=2e-2, atol=2e-3), "c state mismatch"
    assert jnp.allclose(attn, ref_attn, rtol=2e-2, atol=2e-3), "attn mismatch"

    print("KERNEL_OK")
</pallas_src>

<mosaic_0001>
module attributes {stable_mosaic.version = 11 : i64} {
  func.func @_decoder_kernel(%arg0: memref<8x1xi32, #tpu.memory_space<vmem>>, %arg1: memref<8x256xf32, #tpu.memory_space<vmem>>, %arg2: memref<1x8x32xf32, #tpu.memory_space<vmem>>, %arg3: memref<1x8x32xf32, #tpu.memory_space<vmem>>, %arg4: memref<256x32xbf16, #tpu.memory_space<vmem>>, %arg5: memref<200x256xbf16, #tpu.memory_space<vmem>>, %arg6: memref<8x16x32xf32, #tpu.memory_space<vmem>>, %arg7: memref<8x256xf32, #tpu.memory_space<vmem>>, %arg8: memref<1x8x32xf32, #tpu.memory_space<vmem>>, %arg9: memref<1x8x32xf32, #tpu.memory_space<vmem>>, %arg10: memref<8x16xf32, #tpu.memory_space<vmem>>) attributes {dimension_semantics = [], scalar_prefetch = 0 : i64, scratch_operands = 0 : i64, tpu.core_type = #tpu.core_type<tc>} {
    %c0 = arith.constant 0 : index
    %c0_0 = arith.constant 0 : index
    %0 = vector.load %arg5[%c0, %c0_0] : memref<200x256xbf16, #tpu.memory_space<vmem>>, vector<32x256xbf16>
    %1 = arith.extf %0 : vector<32x256xbf16> to vector<32x256xf32>
    %c32 = arith.constant 32 : index
    %c0_1 = arith.constant 0 : index
    %2 = vector.load %arg5[%c32, %c0_1] : memref<200x256xbf16, #tpu.memory_space<vmem>>, vector<32x32xbf16>
    %3 = arith.extf %2 : vector<32x32xbf16> to vector<32x32xf32>
    %c32_2 = arith.constant 32 : index
    %c128 = arith.constant 128 : index
    %4 = vector.load %arg5[%c32_2, %c128] : memref<200x256xbf16, #tpu.memory_space<vmem>>, vector<32x128xbf16>
    %5 = arith.extf %4 : vector<32x128xbf16> to vector<32x128xf32>
    %c64 = arith.constant 64 : index
    %c0_3 = arith.constant 0 : index
    %6 = vector.load %arg5[%c64, %c0_3] : memref<200x256xbf16, #tpu.memory_space<vmem>>, vector<32x128xbf16>
    %7 = arith.extf %6 : vector<32x128xbf16> to vector<32x128xf32>
    %c64_4 = arith.constant 64 : index
    %c128_5 = arith.constant 128 : index
    %8 = vector.load %arg5[%c64_4, %c128_5] : memref<200x256xbf16, #tpu.memory_space<vmem>>, vector<32x32xbf16>
    %9 = arith.extf %8 : vector<32x32xbf16> to vector<32x32xf32>
    %c96 = arith.constant 96 : index
    %c0_6 = arith.constant 0 : index
    %10 = vector.load %arg5[%c96, %c0_6] : memref<200x256xbf16, #tpu.memory_space<vmem>>, vector<32x256xbf16>
    %11 = arith.extf %10 : vector<32x256xbf16> to vector<32x256xf32>
    %c128_7 = arith.constant 128 : index
    %c0_8 = arith.constant 0 : index
    %12 = vector.load %arg5[%c128_7, %c0_8] : memref<200x256xbf16, #tpu.memory_space<vmem>>, vector<32x32xbf16>
    %13 = arith.extf %12 : vector<32x32xbf16> to vector<32x32xf32>
    %c128_9 = arith.constant 128 : index
    %c128_10 = arith.constant 128 : index
    %14 = vector.load %arg5[%c128_9, %c128_10] : memref<200x256xbf16, #tpu.memory_space<vmem>>, vector<32x32xbf16>
    %15 = arith.extf %14 : vector<32x32xbf16> to vector<32x32xf32>
    %c160 = arith.constant 160 : index
    %c0_11 = arith.constant 0 : index
    %16 = vector.load %arg5[%c160, %c0_11] : memref<200x256xbf16, #tpu.memory_space<vmem>>, vector<32x256xbf16>
    %17 = arith.extf %16 : vector<32x256xbf16> to vector<32x256xf32>
    %c192 = arith.constant 192 : index
    %c0_12 = arith.constant 0 : index
    %18 = vector.load %arg5[%c192, %c0_12] : memref<200x256xbf16, #tpu.memory_space<vmem>>, vector<8x256xbf16>
    %19 = arith.extf %18 : vector<8x256xbf16> to vector<8x256xf32>
    %20 = vector.extract_strided_slice %19 {offsets = [0, 0], sizes = [1, 32], strides = [1, 1]} : vector<8x256xf32> to vector<1x32xf32>
    %21 = vector.extract_strided_slice %19 {offsets = [1, 0], sizes = [1, 128], strides = [1, 1]} : vector<8x256xf32> to vector<1x128xf32>
    %22 = vector.extract_strided_slice %19 {offsets = [2, 0], sizes = [1, 32], strides = [1, 1]} : vector<8x256xf32> to vector<1x32xf32>
    %23 = vector.extract_strided_slice %19 {offsets = [3, 0], sizes = [1, 32], strides = [1, 1]} : vector<8x256xf32> to vector<1x32xf32>
    %24 = vector.extract_strided_slice %19 {offsets = [4, 0], sizes = [1, 32], strides = [1, 1]} : vector<8x256xf32> to vector<1x32xf32>
    %25 = vector.extract_strided_slice %19 {offsets = [5, 0], sizes = [1, 32], strides = [1, 1]} : vector<8x256xf32> to vector<1x32xf32>
    %26 = vector.extract_strided_slice %19 {offsets = [6, 0], sizes = [1, 256], strides = [1, 1]} : vector<8x256xf32> to vector<1x256xf32>
    %c0_13 = arith.constant 0 : index
    %c0_14 = arith.constant 0 : index
    %27 = vector.load %arg0[%c0_13, %c0_14] : memref<8x1xi32, #tpu.memory_space<vmem>>, vector<8x1xi32>
    %c0_15 = arith.constant 0 : index
    %c0_16 = arith.constant 0 : index
    %28 = vector.load %arg1[%c0_15, %c0_16] : memref<8x256xf32, #tpu.memory_space<vmem>>, vector<8x256xf32>
    %c0_17 = arith.constant 0 : index
    %c0_18 = arith.constant 0 : index
    %c0_19 = arith.constant 0 : index
    %29 = vector.load %arg2[%c0_17, %c0_18, %c0_19] : memref<1x8x32xf32, #tpu.memory_space<vmem>>, vector<1x8x32xf32>
    %30 = vector.shape_cast %29 : vector<1x8x32xf32> to vector<8x32xf32>
    %c0_20 = arith.constant 0 : index
    %c0_21 = arith.constant 0 : index
    %c0_22 = arith.constant 0 : index
    %31 = vector.load %arg3[%c0_20, %c0_21, %c0_22] : memref<1x8x32xf32, #tpu.memory_space<vmem>>, vector<1x8x32xf32>
    %32 = vector.shape_cast %31 : vector<1x8x32xf32> to vector<8x32xf32>
    %c0_23 = arith.constant 0 : index
    %c0_24 = arith.constant 0 : index
    %33 = vector.load %arg4[%c0_23, %c0_24] : memref<256x32xbf16, #tpu.memory_space<vmem>>, vector<256x32xbf16>
    %34 = arith.extf %33 : vector<256x32xbf16> to vector<256x32xf32>
    %c0_25 = arith.constant 0 : index
    %c0_26 = arith.constant 0 : index
    %c0_27 = arith.constant 0 : index
    %35 = vector.load %arg6[%c0_25, %c0_26, %c0_27] : memref<8x16x32xf32, #tpu.memory_space<vmem>>, vector<8x16x32xf32>
    %36 = tpu.iota {dimensions = array<i32: 1>} : vector<8x256xi32>
    %37 = vector.broadcast %27 : vector<8x1xi32> to vector<8x256xi32>
    %38 = arith.cmpi eq, %36, %37 : vector<8x256xi32>
    %39 = arith.extui %38 : vector<8x256xi1> to vector<8x256xi32>
    %40 = arith.sitofp %39 : vector<8x256xi32> to vector<8x256xf32>
    %cst = arith.constant dense<0.000000e+00> : vector<8x32xf32>
    %41 = tpu.matmul %40, %34, %cst {dimension_numbers = #tpu.dot_dimension_numbers<[1], [0], [0], [1], [0, 0, 1, 1], [], []>} : vector<8x256xf32>, vector<256x32xf32>, vector<8x32xf32> -> vector<8x32xf32>
    %cst_28 = arith.constant 1.000000e+00 : f32
    %42 = vector.broadcast %cst_28 : f32 to vector<8x256xf32>
    %43 = arith.mulf %28, %42 : vector<8x256xf32>
    %cst_29 = arith.constant dense<0xFF800000> : vector<8xf32>
    %44 = vector.multi_reduction <maximumf>, %43, %cst_29 [1] : vector<8x256xf32> to vector<8xf32>
    %45 = vector.shape_cast %44 : vector<8xf32> to vector<8x1xf32>
    %46 = vector.broadcast %45 : vector<8x1xf32> to vector<8x256xf32>
    %47 = arith.subf %43, %46 : vector<8x256xf32>
    %48 = math.exp %47 : vector<8x256xf32>
    %cst_30 = arith.constant dense<0.000000e+00> : vector<8xf32>
    %49 = vector.multi_reduction <add>, %48, %cst_30 [1] : vector<8x256xf32> to vector<8xf32>
    %50 = vector.shape_cast %49 : vector<8xf32> to vector<8x1xf32>
    %51 = tpu.reciprocal %50 {approx = true} : vector<8x1xf32> -> vector<8x1xf32>
    %52 = vector.broadcast %51 : vector<8x1xf32> to vector<8x256xf32>
    %53 = arith.mulf %48, %52 : vector<8x256xf32>
    %cst_31 = arith.constant dense<0.000000e+00> : vector<8x32xf32>
    %54 = tpu.matmul %53, %34, %cst_31 {dimension_numbers = #tpu.dot_dimension_numbers<[1], [0], [0], [1], [0, 0, 1, 1], [], []>} : vector<8x256xf32>, vector<256x32xf32>, vector<8x32xf32> -> vector<8x32xf32>
    %cst_32 = arith.constant dense<0.000000e+00> : vector<8x256xf32>
    %55 = tpu.matmul %41, %1, %cst_32 {dimension_numbers = #tpu.dot_dimension_numbers<[1], [0], [0], [1], [0, 0, 1, 1], [], []>} : vector<8x32xf32>, vector<32x256xf32>, vector<8x256xf32> -> vector<8x256xf32>
    %56 = vector.extract_strided_slice %55 {offsets = [0, 0], sizes = [8, 32], strides = [1, 1]} : vector<8x256xf32> to vector<8x32xf32>
    %cst_33 = arith.constant dense<0.000000e+00> : vector<8x32xf32>
    %57 = tpu.matmul %54, %3, %cst_33 {dimension_numbers = #tpu.dot_dimension_numbers<[1], [0], [0], [1], [0, 0, 1, 1], [], []>} : vector<8x32xf32>, vector<32x32xf32>, vector<8x32xf32> -> vector<8x32xf32>
    %58 = arith.addf %56, %57 : vector<8x32xf32>
    %59 = vector.broadcast %20 : vector<1x32xf32> to vector<8x32xf32>
    %60 = arith.addf %58, %59 : vector<8x32xf32>
    %61 = arith.negf %60 : vector<8x32xf32>
    %62 = math.exp %61 : vector<8x32xf32>
    %cst_34 = arith.constant 1.000000e+00 : f32
    %63 = vector.broadcast %cst_34 : f32 to vector<8x32xf32>
    %64 = arith.addf %63, %62 : vector<8x32xf32>
    %65 = arith.divf %63, %64 : vector<8x32xf32>
    %66 = arith.mulf %65, %41 : vector<8x32xf32>
    %cst_35 = arith.constant 1.000000e+00 : f32
    %67 = vector.broadcast %cst_35 : f32 to vector<8x32xf32>
    %68 = arith.subf %67, %65 : vector<8x32xf32>
    %69 = arith.mulf %68, %54 : vector<8x32xf32>
    %70 = arith.addf %66, %69 : vector<8x32xf32>
    %71 = vector.extract_strided_slice %55 {offsets = [0, 128], sizes = [8, 128], strides = [1, 1]} : vector<8x256xf32> to vector<8x128xf32>
    %cst_36 = arith.constant dense<0.000000e+00> : vector<8x128xf32>
    %72 = tpu.matmul %70, %5, %cst_36 {dimension_numbers = #tpu.dot_dimension_numbers<[1], [0], [0], [1], [0, 0, 1, 1], [], []>} : vector<8x32xf32>, vector<32x128xf32>, vector<8x128xf32> -> vector<8x128xf32>
    %73 = arith.addf %71, %72 : vector<8x128xf32>
    %cst_37 = arith.constant dense<0.000000e+00> : vector<8x128xf32>
    %74 = tpu.matmul %30, %7, %cst_37 {dimension_numbers = #tpu.dot_dimension_numbers<[1], [0], [0], [1], [0, 0, 1, 1], [], []>} : vector<8x32xf32>, vector<32x128xf32>, vector<8x128xf32> -> vector<8x128xf32>
    %75 = arith.addf %73, %74 : vector<8x128xf32>
    %76 = vector.broadcast %21 : vector<1x128xf32> to vector<8x128xf32>
    %77 = arith.addf %75, %76 : vector<8x128xf32>
    %78 = vector.extract_strided_slice %77 {offsets = [0, 0], sizes = [8, 32], strides = [1, 1]} : vector<8x128xf32> to vector<8x32xf32>
    %79 = arith.negf %78 : vector<8x32xf32>
    %80 = math.exp %79 : vector<8x32xf32>
    %cst_38 = arith.constant 1.000000e+00 : f32
    %81 = vector.broadcast %cst_38 : f32 to vector<8x32xf32>
    %82 = arith.addf %81, %80 : vector<8x32xf32>
    %83 = arith.divf %81, %82 : vector<8x32xf32>
    %84 = vector.extract_strided_slice %77 {offsets = [0, 32], sizes = [8, 32], strides = [1, 1]} : vector<8x128xf32> to vector<8x32xf32>
    %85 = arith.negf %84 : vector<8x32xf32>
    %86 = math.exp %85 : vector<8x32xf32>
    %cst_39 = arith.constant 1.000000e+00 : f32
    %87 = vector.broadcast %cst_39 : f32 to vector<8x32xf32>
    %88 = arith.addf %87, %86 : vector<8x32xf32>
    %89 = arith.divf %87, %88 : vector<8x32xf32>
    %90 = vector.extract_strided_slice %77 {offsets = [0, 64], sizes = [8, 32], strides = [1, 1]} : vector<8x128xf32> to vector<8x32xf32>
    %91 = math.tanh %90 : vector<8x32xf32>
    %92 = vector.extract_strided_slice %77 {offsets = [0, 96], sizes = [8, 32], strides = [1, 1]} : vector<8x128xf32> to vector<8x32xf32>
    %93 = arith.negf %92 : vector<8x32xf32>
    %94 = math.exp %93 : vector<8x32xf32>
    %cst_40 = arith.constant 1.000000e+00 : f32
    %95 = vector.broadcast %cst_40 : f32 to vector<8x32xf32>
    %96 = arith.addf %95, %94 : vector<8x32xf32>
    %97 = arith.divf %95, %96 : vector<8x32xf32>
    %98 = arith.mulf %89, %32 : vector<8x32xf32>
    %99 = arith.mulf %83, %91 : vector<8x32xf32>
    %100 = arith.addf %98, %99 : vector<8x32xf32>
    %101 = math.tanh %100 : vector<8x32xf32>
    %102 = arith.mulf %97, %101 : vector<8x32xf32>
    %cst_41 = arith.constant dense<0.000000e+00> : vector<8x256xf32>
    %103 = tpu.matmul %102, %11, %cst_41 {dimension_numbers = #tpu.dot_dimension_numbers<[1], [0], [0], [1], [0, 0, 1, 1], [], []>} : vector<8x32xf32>, vector<32x256xf32>, vector<8x256xf32> -> vector<8x256xf32>
    %104 = vector.extract_strided_slice %103 {offsets = [0, 0], sizes = [8, 32], strides = [1, 1]} : vector<8x256xf32> to vector<8x32xf32>
    %105 = vector.broadcast %22 : vector<1x32xf32> to vector<8x32xf32>
    %106 = arith.addf %104, %105 : vector<8x32xf32>
    %cst_42 = arith.constant 0.000000e+00 : f32
    %107 = vector.broadcast %cst_42 : f32 to vector<8x32xf32>
    %108 = arith.cmpf ogt, %106, %107 : vector<8x32xf32>
    %109 = math.exp %106 : vector<8x32xf32>
    %cst_43 = arith.constant 1.000000e+00 : f32
    %110 = vector.broadcast %cst_43 : f32 to vector<8x32xf32>
    %111 = arith.subf %109, %110 : vector<8x32xf32>
    %cst_44 = arith.constant 1.67326319 : f32
    %112 = vector.broadcast %cst_44 : f32 to vector<8x32xf32>
    %113 = arith.mulf %112, %111 : vector<8x32xf32>
    %114 = arith.select %108, %106, %113 : vector<8x32xi1>, vector<8x32xf32>
    %cst_45 = arith.constant 1.05070102 : f32
    %115 = vector.broadcast %cst_45 : f32 to vector<8x32xf32>
    %116 = arith.mulf %115, %114 : vector<8x32xf32>
    %cst_46 = arith.constant dense<0.000000e+00> : vector<8x32xf32>
    %117 = tpu.matmul %116, %9, %cst_46 {dimension_numbers = #tpu.dot_dimension_numbers<[1], [0], [0], [1], [0, 0, 1, 1], [], []>} : vector<8x32xf32>, vector<32x32xf32>, vector<8x32xf32> -> vector<8x32xf32>
    %118 = vector.broadcast %23 : vector<1x32xf32> to vector<8x32xf32>
    %119 = arith.addf %117, %118 : vector<8x32xf32>
    %cst_47 = arith.constant 0.000000e+00 : f32
    %120 = vector.broadcast %cst_47 : f32 to vector<8x32xf32>
    %121 = arith.cmpf ogt, %119, %120 : vector<8x32xf32>
    %122 = math.exp %119 : vector<8x32xf32>
    %cst_48 = arith.constant 1.000000e+00 : f32
    %123 = vector.broadcast %cst_48 : f32 to vector<8x32xf32>
    %124 = arith.subf %122, %123 : vector<8x32xf32>
    %cst_49 = arith.constant 1.67326319 : f32
    %125 = vector.broadcast %cst_49 : f32 to vector<8x32xf32>
    %126 = arith.mulf %125, %124 : vector<8x32xf32>
    %127 = arith.select %121, %119, %126 : vector<8x32xi1>, vector<8x32xf32>
    %cst_50 = arith.constant 1.05070102 : f32
    %128 = vector.broadcast %cst_50 : f32 to vector<8x32xf32>
    %129 = arith.mulf %128, %127 : vector<8x32xf32>
    %130 = vector.shape_cast %129 : vector<8x32xf32> to vector<8x1x32xf32>
    %131 = vector.broadcast %130 : vector<8x1x32xf32> to vector<8x16x32xf32>
    %132 = arith.mulf %35, %131 : vector<8x16x32xf32>
    %cst_51 = arith.constant dense<0.000000e+00> : vector<8x16xf32>
    %133 = vector.multi_reduction <add>, %132, %cst_51 [2] : vector<8x16x32xf32> to vector<8x16xf32>
    %cst_52 = arith.constant dense<0xFF800000> : vector<8xf32>
    %134 = vector.multi_reduction <maximumf>, %133, %cst_52 [1] : vector<8x16xf32> to vector<8xf32>
    %135 = vector.shape_cast %134 : vector<8xf32> to vector<8x1xf32>
    %136 = vector.broadcast %135 : vector<8x1xf32> to vector<8x16xf32>
    %137 = arith.subf %133, %136 : vector<8x16xf32>
    %138 = math.exp %137 : vector<8x16xf32>
    %cst_53 = arith.constant dense<0.000000e+00> : vector<8xf32>
    %139 = vector.multi_reduction <add>, %138, %cst_53 [1] : vector<8x16xf32> to vector<8xf32>
    %140 = vector.shape_cast %139 : vector<8xf32> to vector<8x1xf32>
    %141 = tpu.reciprocal %140 {approx = true} : vector<8x1xf32> -> vector<8x1xf32>
    %142 = vector.broadcast %141 : vector<8x1xf32> to vector<8x16xf32>
    %143 = arith.mulf %138, %142 : vector<8x16xf32>
    %144 = vector.shape_cast %143 : vector<8x16xf32> to vector<8x16x1xf32>
    %145 = vector.broadcast %144 : vector<8x16x1xf32> to vector<8x16x32xf32>
    %146 = arith.mulf %145, %35 : vector<8x16x32xf32>
    %cst_54 = arith.constant dense<0.000000e+00> : vector<8x32xf32>
    %147 = vector.multi_reduction <add>, %146, %cst_54 [1] : vector<8x16x32xf32> to vector<8x32xf32>
    %cst_55 = arith.constant dense<0.000000e+00> : vector<8x32xf32>
    %148 = tpu.matmul %147, %13, %cst_55 {dimension_numbers = #tpu.dot_dimension_numbers<[1], [0], [0], [1], [0, 0, 1, 1], [], []>} : vector<8x32xf32>, vector<32x32xf32>, vector<8x32xf32> -> vector<8x32xf32>
    %149 = vector.extract_strided_slice %103 {offsets = [0, 128], sizes = [8, 32], strides = [1, 1]} : vector<8x256xf32> to vector<8x32xf32>
    %150 = arith.addf %148, %149 : vector<8x32xf32>
    %151 = vector.broadcast %24 : vector<1x32xf32> to vector<8x32xf32>
    %152 = arith.addf %150, %151 : vector<8x32xf32>
    %cst_56 = arith.constant 0.000000e+00 : f32
    %153 = vector.broadcast %cst_56 : f32 to vector<8x32xf32>
    %154 = arith.cmpf ogt, %152, %153 : vector<8x32xf32>
    %155 = math.exp %152 : vector<8x32xf32>
    %cst_57 = arith.constant 1.000000e+00 : f32
    %156 = vector.broadcast %cst_57 : f32 to vector<8x32xf32>
    %157 = arith.subf %155, %156 : vector<8x32xf32>
    %cst_58 = arith.constant 1.67326319 : f32
    %158 = vector.broadcast %cst_58 : f32 to vector<8x32xf32>
    %159 = arith.mulf %158, %157 : vector<8x32xf32>
    %160 = arith.select %154, %152, %159 : vector<8x32xi1>, vector<8x32xf32>
    %cst_59 = arith.constant 1.05070102 : f32
    %161 = vector.broadcast %cst_59 : f32 to vector<8x32xf32>
    %162 = arith.mulf %161, %160 : vector<8x32xf32>
    %cst_60 = arith.constant dense<0.000000e+00> : vector<8x32xf32>
    %163 = tpu.matmul %162, %15, %cst_60 {dimension_numbers = #tpu.dot_dimension_numbers<[1], [0], [0], [1], [0, 0, 1, 1], [], []>} : vector<8x32xf32>, vector<32x32xf32>, vector<8x32xf32> -> vector<8x32xf32>
    %164 = vector.broadcast %25 : vector<1x32xf32> to vector<8x32xf32>
    %165 = arith.addf %163, %164 : vector<8x32xf32>
    %cst_61 = arith.constant 0.000000e+00 : f32
    %166 = vector.broadcast %cst_61 : f32 to vector<8x32xf32>
    %167 = arith.cmpf ogt, %165, %166 : vector<8x32xf32>
    %168 = math.exp %165 : vector<8x32xf32>
    %cst_62 = arith.constant 1.000000e+00 : f32
    %169 = vector.broadcast %cst_62 : f32 to vector<8x32xf32>
    %170 = arith.subf %168, %169 : vector<8x32xf32>
    %cst_63 = arith.constant 1.67326319 : f32
    %171 = vector.broadcast %cst_63 : f32 to vector<8x32xf32>
    %172 = arith.mulf %171, %170 : vector<8x32xf32>
    %173 = arith.select %167, %165, %172 : vector<8x32xi1>, vector<8x32xf32>
    %cst_64 = arith.constant 1.05070102 : f32
    %174 = vector.broadcast %cst_64 : f32 to vector<8x32xf32>
    %175 = arith.mulf %174, %173 : vector<8x32xf32>
    %cst_65 = arith.constant dense<0.000000e+00> : vector<8x256xf32>
    %176 = tpu.matmul %175, %17, %cst_65 {dimension_numbers = #tpu.dot_dimension_numbers<[1], [0], [0], [1], [0, 0, 1, 1], [], []>} : vector<8x32xf32>, vector<32x256xf32>, vector<8x256xf32> -> vector<8x256xf32>
    %177 = vector.broadcast %26 : vector<1x256xf32> to vector<8x256xf32>
    %178 = arith.addf %176, %177 : vector<8x256xf32>
    %c0_66 = arith.constant 0 : index
    %c0_67 = arith.constant 0 : index
    %179 = vector.load %arg7[%c0_66, %c0_67] : memref<8x256xf32, #tpu.memory_space<vmem>>, vector<8x256xf32>
    tpu.vector_store %arg7[%c0_66, %c0_67], %178 {strides = array<i32>} : memref<8x256xf32, #tpu.memory_space<vmem>>, vector<8x256xf32>,
    %c0_68 = arith.constant 0 : index
    %c0_69 = arith.constant 0 : index
    %c0_70 = arith.constant 0 : index
    %180 = vector.load %arg8[%c0_68, %c0_69, %c0_70] : memref<1x8x32xf32, #tpu.memory_space<vmem>>, vector<1x8x32xf32>
    %181 = vector.shape_cast %180 : vector<1x8x32xf32> to vector<8x32xf32>
    %182 = vector.shape_cast %102 : vector<8x32xf32> to vector<1x8x32xf32>
    tpu.vector_store %arg8[%c0_68, %c0_69, %c0_70], %182 {strides = array<i32>} : memref<1x8x32xf32, #tpu.memory_space<vmem>>, vector<1x8x32xf32>,
    %c0_71 = arith.constant 0 : index
    %c0_72 = arith.constant 0 : index
    %c0_73 = arith.constant 0 : index
    %183 = vector.load %arg9[%c0_71, %c0_72, %c0_73] : memref<1x8x32xf32, #tpu.memory_space<vmem>>, vector<1x8x32xf32>
    %184 = vector.shape_cast %183 : vector<1x8x32xf32> to vector<8x32xf32>
    %185 = vector.shape_cast %100 : vector<8x32xf32> to vector<1x8x32xf32>
    tpu.vector_store %arg9[%c0_71, %c0_72, %c0_73], %185 {strides = array<i32>} : memref<1x8x32xf32, #tpu.memory_space<vmem>>, vector<1x8x32xf32>,
    %c0_74 = arith.constant 0 : index
    %c0_75 = arith.constant 0 : index
    %186 = vector.load %arg10[%c0_74, %c0_75] : memref<8x16xf32, #tpu.memory_space<vmem>>, vector<8x16xf32>
    tpu.vector_store %arg10[%c0_74, %c0_75], %143 {strides = array<i32>} : memref<8x16xf32, #tpu.memory_space<vmem>>, vector<8x16xf32>,
    return
  }
}

</mosaic_0001>

<llo_original>
// kernel: tpu_custom_call.1
$region0: #{tpu_custom_call.1}
  #allocation0 [shape = 'u32[]', space=smem, size = 0x4, offset = 0x4, fixed_abs, tag = 'smem constant byte address 0x4 - core index']
  #allocation1 [shape = 'u32[144,128]{1,0:T(1,128)}', space=vmem, size = 0x12000, scoped, tag = 'internal scratch']
  %s0 = inlined_call_operand.vmem [shape: s32[8,1], index: 0, kind: input, shape index: {}]
  %s1 = inlined_call_operand.vmem [shape: f32[8,256], index: 1, kind: input, shape index: {}]
  %s2 = inlined_call_operand.vmem [shape: f32[1,8,32], index: 2, kind: input, shape index: {}]
  %s3 = inlined_call_operand.vmem [shape: f32[1,8,32], index: 3, kind: input, shape index: {}]
  %s4 = inlined_call_operand.vmem [shape: bf16[256,32], index: 4, kind: input, shape index: {}]
  %s5 = inlined_call_operand.hbm [shape: bf16[200,256], index: 5, kind: input, shape index: {}]
  %s6 = inlined_call_operand.vmem [shape: f32[8,16,32], index: 6, kind: input, shape index: {}]
  %s7 = inlined_call_operand.hbm [shape: f32[8,256], index: 7, kind: output, shape index: {0}]
  %s8 = inlined_call_operand.hbm [shape: f32[1,8,32], index: 8, kind: output, shape index: {1}]
  %s9 = inlined_call_operand.hbm [shape: f32[1,8,32], index: 9, kind: output, shape index: {2}]
  %s10 = inlined_call_operand.hbm [shape: f32[8,16], index: 10, kind: output, shape index: {3}]
  %11 = xla_tuple %s7, %s8, %s9, %s10
  %s12 = sld [smem:[#allocation0]]
  $region66: #{tpu_custom_call.1} parent=0
    _
  %s14 = ssub.s32 1, %s12
  %s15 = scalar_select 0, %s14, %s12
  $region1: #{tpu_custom_call.1} parent=0
    #allocation2 [shape = 'u8[102400]{0}', space=vmem, size = 0x19000, scoped, tag = 'input window, operand 5, single buffered']
    #allocation3 [shape = 's32[1]{0}', space=sflag, size = 0x4, scoped, tag = 'scoped memory for tpu_custom_call.1']
    #allocation4 [shape = 's32[1]{0}', space=sflag, size = 0x4, scoped, tag = 'scoped memory for tpu_custom_call.1']
    #allocation5 [shape = 'u8[8192]{0}', space=vmem, size = 0x2000, scoped, tag = 'output window, operand 0, single buffered']
    #allocation6 [shape = 'u8[4096]{0}', space=vmem, size = 0x1000, scoped, tag = 'output window, operand 1, single buffered']
    #allocation7 [shape = 's32[1]{0}', space=sflag, size = 0x4, scoped, tag = 'scoped memory for tpu_custom_call.1']
    #allocation8 [shape = 'u8[4096]{0}', space=vmem, size = 0x1000, scoped, tag = 'output window, operand 2, single buffered']
    #allocation9 [shape = 'u8[4096]{0}', space=vmem, size = 0x1000, scoped, tag = 'output window, operand 3, single buffered']
    #allocation10 [shape = 's32[1]{0}', space=sflag, size = 0x4, scoped, tag = 'scoped memory for tpu_custom_call.1']
    %16 = vsyncpa [#allocation3], 0
    %17 = vsyncpa [#allocation4], 0
    %18 = vsyncpa [#allocation7], 0
    %19 = vsyncpa [#allocation10], 0
    // Predicated region
    $region2: #{tpu_custom_call.1} parent=1 // pred_check
      _
    $region3: #{tpu_custom_call.1} parent=1 // pred_check_branch
      %21 = sbr.rel (0) target = $region5
    $region4: #{tpu_custom_call.1} parent=1 // pred_region
      _
    $region5: #{tpu_custom_call.1} parent=1 // pred_fallthru
      _
    // Predicated region
    $region6: #{tpu_custom_call.1} parent=1 // pred_check
      _
    $region7: #{tpu_custom_call.1} parent=1 // pred_check_branch
      %23 = sbr.rel (0) target = $region9
    $region8: #{tpu_custom_call.1} parent=1 // pred_region
      _
    $region9: #{tpu_custom_call.1} parent=1 // pred_fallthru
      _
    // Predicated region
    $region10: #{tpu_custom_call.1} parent=1 // pred_check
      _
    $region11: #{tpu_custom_call.1} parent=1 // pred_check_branch
      %25 = sbr.rel (0) target = $region13
    $region12: #{tpu_custom_call.1} parent=1 // pred_region
      _
    $region13: #{tpu_custom_call.1} parent=1 // pred_fallthru
      _
    // Predicated region
    $region14: #{tpu_custom_call.1} parent=1 // pred_check
      _
    $region15: #{tpu_custom_call.1} parent=1 // pred_check_branch
      %27 = sbr.rel (0) target = $region17
    $region16: #{tpu_custom_call.1} parent=1 // pred_region
      _
    $region17: #{tpu_custom_call.1} parent=1 // pred_fallthru
      _
    // Predicated region
    $region18: #{tpu_custom_call.1} parent=1 // pred_check
      _
    $region19: #{tpu_custom_call.1} parent=1 // pred_check_branch
      %29 = sbr.rel (0) target = $region21
    $region20: #{tpu_custom_call.1} parent=1 // pred_region
      _
    $region21: #{tpu_custom_call.1} parent=1 // pred_fallthru
      _
    // Predicated region
    $region22: #{tpu_custom_call.1} parent=1 // pred_check
      _
    $region23: #{tpu_custom_call.1} parent=1 // pred_check_branch
      %31 = sbr.rel (0) target = $region25
    $region24: #{tpu_custom_call.1} parent=1 // pred_region
      %s33 = ssub.s32 3200, 3200
      %34 = vsyncadd [#allocation3], %s33
      %s35 = sshll.u32 [#allocation2], 4
      %s36 = int_to_ptr.vmem [resolvable:$true] %s35
      %41 = dma.hbm_to_vmem [thread:$0]  %s5, 3200, %s36, [#allocation3], 128, 128, 8
    $region25: #{tpu_custom_call.1} parent=1 // pred_fallthru
      _
    // Predicated region
    $region26: #{tpu_custom_call.1} parent=1 // pred_check
      _
    $region27: #{tpu_custom_call.1} parent=1 // pred_check_branch
      %43 = sbr.rel (0) target = $region29
    $region28: #{tpu_custom_call.1} parent=1 // pred_region
      _
    $region29: #{tpu_custom_call.1} parent=1 // pred_fallthru
      _
    // Predicated region
    $region30: #{tpu_custom_call.1} parent=1 // pred_check
      _
    $region31: #{tpu_custom_call.1} parent=1 // pred_check_branch
      %45 = sbr.rel (0) target = $region33
    $region32: #{tpu_custom_call.1} parent=1 // pred_region
      %46 = dma.done [#allocation3], 3200
    $region33: #{tpu_custom_call.1} parent=1 // pred_fallthru
      _
    %v47 = vld [vmem:[#allocation2] sm:$0xff]
    %v48 = vld [vmem:[#allocation2 + $0x8] sm:$0xff]
    %v49 = vld [vmem:[#allocation2 + $0x10] sm:$0xff]
    %v50 = vld [vmem:[#allocation2 + $0x18] sm:$0xff]
    %v51 = vunpack.c.l.bf16 %v47
    %v52 = vunpack.c.h.bf16 %v47
    %v53 = vunpack.c.l.bf16 %v48
    %v54 = vunpack.c.h.bf16 %v48
    %v55 = vunpack.c.l.bf16 %v49
    %v56 = vunpack.c.h.bf16 %v49
    %v57 = vunpack.c.l.bf16 %v50
    %v58 = vunpack.c.h.bf16 %v50
    %v59 = vld [vmem:[#allocation2 + $0x20] sm:$0xf]
    %v60 = vld [vmem:[#allocation2 + $0x28] sm:$0xf]
    %v61 = vld [vmem:[#allocation2 + $0x30] sm:$0xf]
    %v62 = vld [vmem:[#allocation2 + $0x38] sm:$0xf]
    %v63 = vunpack.c.l.bf16 %v59
    %v64 = vunpack.c.l.bf16 %v60
    %v65 = vunpack.c.l.bf16 %v61
    %v66 = vunpack.c.l.bf16 %v62
    %v67 = vld [vmem:[#allocation2 + $0x24] sm:$0xf]
    %v68 = vld [vmem:[#allocation2 + $0x2c] sm:$0xf]
    %v69 = vld [vmem:[#allocation2 + $0x34] sm:$0xf]
    %v70 = vld [vmem:[#allocation2 + $0x3c] sm:$0xf]
    %v71 = vunpack.c.l.bf16 %v67
    %v72 = vunpack.c.l.bf16 %v68
    %v73 = vunpack.c.l.bf16 %v69
    %v74 = vunpack.c.l.bf16 %v70
    %v75 = vld [vmem:[#allocation2 + $0x40] sm:$0xf]
    %v76 = vld [vmem:[#allocation2 + $0x48] sm:$0xf]
    %v77 = vld [vmem:[#allocation2 + $0x50] sm:$0xf]
    %v78 = vld [vmem:[#allocation2 + $0x58] sm:$0xf]
    %v79 = vunpack.c.l.bf16 %v75
    %v80 = vunpack.c.l.bf16 %v76
    %v81 = vunpack.c.l.bf16 %v77
    %v82 = vunpack.c.l.bf16 %v78
    %v83 = vld [vmem:[#allocation2 + $0x44] sm:$0xf]
    %v84 = vld [vmem:[#allocation2 + $0x4c] sm:$0xf]
    %v85 = vld [vmem:[#allocation2 + $0x54] sm:$0xf]
    %v86 = vld [vmem:[#allocation2 + $0x5c] sm:$0xf]
    %v87 = vunpack.c.l.bf16 %v83
    %v88 = vunpack.c.l.bf16 %v84
    %v89 = vunpack.c.l.bf16 %v85
    %v90 = vunpack.c.l.bf16 %v86
    %v91 = vld [vmem:[#allocation2 + $0x60] sm:$0xff]
    %v92 = vld [vmem:[#allocation2 + $0x68] sm:$0xff]
    %v93 = vld [vmem:[#allocation2 + $0x70] sm:$0xff]
    %v94 = vld [vmem:[#allocation2 + $0x78] sm:$0xff]
    %v95 = vunpack.c.l.bf16 %v91
    %v96 = vunpack.c.h.bf16 %v91
    %v97 = vunpack.c.l.bf16 %v92
    %v98 = vunpack.c.h.bf16 %v92
    %v99 = vunpack.c.l.bf16 %v93
    %v100 = vunpack.c.h.bf16 %v93
    %v101 = vunpack.c.l.bf16 %v94
    %v102 = vunpack.c.h.bf16 %v94
    %v103 = vld [vmem:[#allocation2 + $0x80] sm:$0xf]
    %v104 = vld [vmem:[#allocation2 + $0x88] sm:$0xf]
    %v105 = vld [vmem:[#allocation2 + $0x90] sm:$0xf]
    %v106 = vld [vmem:[#allocation2 + $0x98] sm:$0xf]
    %v107 = vunpack.c.l.bf16 %v103
    %v108 = vunpack.c.l.bf16 %v104
    %v109 = vunpack.c.l.bf16 %v105
    %v110 = vunpack.c.l.bf16 %v106
    %v111 = vld [vmem:[#allocation2 + $0x84] sm:$0xf]
    %v112 = vld [vmem:[#allocation2 + $0x8c] sm:$0xf]
    %v113 = vld [vmem:[#allocation2 + $0x94] sm:$0xf]
    %v114 = vld [vmem:[#allocation2 + $0x9c] sm:$0xf]
    %v115 = vunpack.c.l.bf16 %v111
    %v116 = vunpack.c.l.bf16 %v112
    %v117 = vunpack.c.l.bf16 %v113
    %v118 = vunpack.c.l.bf16 %v114
    %v119 = vld [vmem:[#allocation2 + $0xa0] sm:$0xff]
    %v120 = vld [vmem:[#allocation2 + $0xa8] sm:$0xff]
    %v121 = vld [vmem:[#allocation2 + $0xb0] sm:$0xff]
    %v122 = vld [vmem:[#allocation2 + $0xb8] sm:$0xff]
    %v123 = vunpack.c.l.bf16 %v119
    %v124 = vunpack.c.h.bf16 %v119
    %v125 = vunpack.c.l.bf16 %v120
    %v126 = vunpack.c.h.bf16 %v120
    %v127 = vunpack.c.l.bf16 %v121
    %v128 = vunpack.c.h.bf16 %v121
    %v129 = vunpack.c.l.bf16 %v122
    %v130 = vunpack.c.h.bf16 %v122
    %v131 = vld [vmem:[#allocation2 + $0xc0] sm:$0xff]
    %v132 = vunpack.c.l.bf16 %v131
    %v133 = vunpack.c.h.bf16 %v131
    %v134 = vld [vmem:[%s0] sm:$0xff]
    %v135 = vld [vmem:[%s1] sm:$0xff]
    %v136 = vld [vmem:[%s1 + $0x8] sm:$0xff]
    %v137 = vld [vmem:[%s2] sm:$0xff]
    %v138 = vld [vmem:[%s3] sm:$0xff]
    %v139 = vld [vmem:[%s4] sm:$0xf]
    %v140 = vld [vmem:[%s4 + $0x4] sm:$0xf]
    %v141 = vld [vmem:[%s4 + $0x8] sm:$0xf]
    %v142 = vld [vmem:[%s4 + $0xc] sm:$0xf]
    %v143 = vld [vmem:[%s4 + $0x10] sm:$0xf]
    %v144 = vld [vmem:[%s4 + $0x14] sm:$0xf]
    %v145 = vld [vmem:[%s4 + $0x18] sm:$0xf]
    %v146 = vld [vmem:[%s4 + $0x1c] sm:$0xf]
    %v147 = vld [vmem:[%s4 + $0x20] sm:$0xf]
    %v148 = vld [vmem:[%s4 + $0x24] sm:$0xf]
    %v149 = vld [vmem:[%s4 + $0x28] sm:$0xf]
    %v150 = vld [vmem:[%s4 + $0x2c] sm:$0xf]
    %v151 = vld [vmem:[%s4 + $0x30] sm:$0xf]
    %v152 = vld [vmem:[%s4 + $0x34] sm:$0xf]
    %v153 = vld [vmem:[%s4 + $0x38] sm:$0xf]
    %v154 = vld [vmem:[%s4 + $0x3c] sm:$0xf]
    %v155 = vld [vmem:[%s4 + $0x40] sm:$0xf]
    %v156 = vld [vmem:[%s4 + $0x44] sm:$0xf]
    %v157 = vld [vmem:[%s4 + $0x48] sm:$0xf]
    %v158 = vld [vmem:[%s4 + $0x4c] sm:$0xf]
    %v159 = vld [vmem:[%s4 + $0x50] sm:$0xf]
    %v160 = vld [vmem:[%s4 + $0x54] sm:$0xf]
    %v161 = vld [vmem:[%s4 + $0x58] sm:$0xf]
    %v162 = vld [vmem:[%s4 + $0x5c] sm:$0xf]
    %v163 = vld [vmem:[%s4 + $0x60] sm:$0xf]
    %v164 = vld [vmem:[%s4 + $0x64] sm:$0xf]
    %v165 = vld [vmem:[%s4 + $0x68] sm:$0xf]
    %v166 = vld [vmem:[%s4 + $0x6c] sm:$0xf]
    %v167 = vld [vmem:[%s4 + $0x70] sm:$0xf]
    %v168 = vld [vmem:[%s4 + $0x74] sm:$0xf]
    %v169 = vld [vmem:[%s4 + $0x78] sm:$0xf]
    %v170 = vld [vmem:[%s4 + $0x7c] sm:$0xf]
    %v171 = vunpack.c.l.bf16 %v139
    %v172 = vunpack.c.l.bf16 %v140
    %v173 = vunpack.c.l.bf16 %v141
    %v174 = vunpack.c.l.bf16 %v142
    %v175 = vunpack.c.l.bf16 %v143
    %v176 = vunpack.c.l.bf16 %v144
    %v177 = vunpack.c.l.bf16 %v145
    %v178 = vunpack.c.l.bf16 %v146
    %v179 = vunpack.c.l.bf16 %v147
    %v180 = vunpack.c.l.bf16 %v148
    %v181 = vunpack.c.l.bf16 %v149
    %v182 = vunpack.c.l.bf16 %v150
    %v183 = vunpack.c.l.bf16 %v151
    %v184 = vunpack.c.l.bf16 %v152
    %v185 = vunpack.c.l.bf16 %v153
    %v186 = vunpack.c.l.bf16 %v154
    %v187 = vunpack.c.l.bf16 %v155
    %v188 = vunpack.c.l.bf16 %v156
    %v189 = vunpack.c.l.bf16 %v157
    %v190 = vunpack.c.l.bf16 %v158
    %v191 = vunpack.c.l.bf16 %v159
    %v192 = vunpack.c.l.bf16 %v160
    %v193 = vunpack.c.l.bf16 %v161
    %v194 = vunpack.c.l.bf16 %v162
    %v195 = vunpack.c.l.bf16 %v163
    %v196 = vunpack.c.l.bf16 %v164
    %v197 = vunpack.c.l.bf16 %v165
    %v198 = vunpack.c.l.bf16 %v166
    %v199 = vunpack.c.l.bf16 %v167
    %v200 = vunpack.c.l.bf16 %v168
    %v201 = vunpack.c.l.bf16 %v169
    %v202 = vunpack.c.l.bf16 %v170
    %v203 = vld [vmem:[%s6] sm:$0xff]
    %v204 = vld [vmem:[%s6 + $0x8] sm:$0xff]
    %v205 = vld [vmem:[%s6 + $0x10] sm:$0xff]
    %v206 = vld [vmem:[%s6 + $0x18] sm:$0xff]
    %v207 = vld [vmem:[%s6 + $0x20] sm:$0xff]
    %v208 = vld [vmem:[%s6 + $0x28] sm:$0xff]
    %v209 = vld [vmem:[%s6 + $0x30] sm:$0xff]
    %v210 = vld [vmem:[%s6 + $0x38] sm:$0xff]
    %v211 = vld [vmem:[%s6 + $0x40] sm:$0xff]
    %v212 = vld [vmem:[%s6 + $0x48] sm:$0xff]
    %v213 = vld [vmem:[%s6 + $0x50] sm:$0xff]
    %v214 = vld [vmem:[%s6 + $0x58] sm:$0xff]
    %v215 = vld [vmem:[%s6 + $0x60] sm:$0xff]
    %v216 = vld [vmem:[%s6 + $0x68] sm:$0xff]
    %v217 = vld [vmem:[%s6 + $0x70] sm:$0xff]
    %v218 = vld [vmem:[%s6 + $0x78] sm:$0xff]
    %v219 = vlaneseq
    %v220 = vand.u32 %v219, 127
    %v221 = vadd.s32 %v220, 128
    %222 = vset.pattern.permute.xlu0 0
    %223 = vperm.xlu0 %222, %v134
    %v224 = vpop.permute.xlu0 %223
    %vm225 = vcmp.eq.s32.totalorder %v220, %v224
    %vm226 = vcmp.eq.s32.totalorder %v221, %v224
    %v227 = vsel %vm225, 1, 0
    %v228 = vsel %vm226, 1, 0
    %v229 = vcvt.s32.f32 %v227
    %v230 = vcvt.s32.f32 %v228
    %231 = vmatprep.subr.mxu0 0.0
    %232 = vmatpush1.msra.mxu0 %v171
    %233 = vmatprep.subr.mxu0 0.0
    %234 = vmatpush1.msra.mxu0 %v172
    %235 = vmatprep.subr.mxu0 0.0
    %236 = vmatpush1.msra.mxu0 %v173
    %237 = vmatprep.subr.mxu0 0.0
    %238 = vmatpush1.msra.mxu0 %v174
    %239 = vmatprep.subr.mxu0 0.0
    %240 = vmatpush1.msra.mxu0 %v175
    %241 = vmatprep.subr.mxu0 0.0
    %242 = vmatpush1.msra.mxu0 %v176
    %243 = vmatprep.subr.mxu0 0.0
    %244 = vmatpush1.msra.mxu0 %v177
    %245 = vmatprep.subr.mxu0 0.0
    %246 = vmatpush1.msra.mxu0 %v178
    %247 = vmatprep.subr.mxu0 0.0
    %248 = vmatpush1.msra.mxu0 %v179
    %249 = vmatprep.subr.mxu0 0.0
    %250 = vmatpush1.msra.mxu0 %v180
    %251 = vmatprep.subr.mxu0 0.0
    %252 = vmatpush1.msra.mxu0 %v181
    %253 = vmatprep.subr.mxu0 0.0
    %254 = vmatpush1.msra.mxu0 %v182
    %255 = vmatprep.subr.mxu0 0.0
    %256 = vmatpush1.msra.mxu0 %v183
    %257 = vmatprep.subr.mxu0 0.0
    %258 = vmatpush1.msra.mxu0 %v184
    %259 = vmatprep.subr.mxu0 0.0
    %260 = vmatpush1.msra.mxu0 %v185
    %261 = vmatprep.subr.mxu0 0.0
    %262 = vmatpush1.msra.mxu0 %v186
    %263 = vmatprep.subr.mxu0 0.0
    %264 = vmatpush1.msra.mxu0 %v187
    %265 = vmatprep.subr.mxu0 0.0
    %266 = vmatpush1.msra.mxu0 %v188
    %267 = vmatprep.subr.mxu0 0.0
    %268 = vmatpush1.msra.mxu0 %v189
    %269 = vmatprep.subr.mxu0 0.0
    %270 = vmatpush1.msra.mxu0 %v190
    %271 = vmatprep.subr.mxu0 0.0
    %272 = vmatpush1.msra.mxu0 %v191
    %273 = vmatprep.subr.mxu0 0.0
    %274 = vmatpush1.msra.mxu0 %v192
    %275 = vmatprep.subr.mxu0 0.0
    %276 = vmatpush1.msra.mxu0 %v193
    %277 = vmatprep.subr.mxu0 0.0
    %278 = vmatpush1.msra.mxu0 %v194
    %279 = vmatprep.subr.mxu0 0.0
    %280 = vmatpush1.msra.mxu0 %v195
    %281 = vmatprep.subr.mxu0 0.0
    %282 = vmatpush1.msra.mxu0 %v196
    %283 = vmatprep.subr.mxu0 0.0
    %284 = vmatpush1.msra.mxu0 %v197
    %285 = vmatprep.subr.mxu0 0.0
    %286 = vmatpush1.msra.mxu0 %v198
    %287 = vmatprep.subr.mxu0 0.0
    %288 = vmatpush1.msra.mxu0 %v199
    %289 = vmatprep.subr.mxu0 0.0
    %290 = vmatpush1.msra.mxu0 %v200
    %291 = vmatprep.subr.mxu0 0.0
    %292 = vmatpush1.msra.mxu0 %v201
    %293 = vmatprep.subr.mxu0 0.0
    %294 = vmatpush1.msra.mxu0 %v202
    %295 = vmatprep.mubr.f32.mxu0 %v230
    %296 = vmatmul.mubr.f32.gmra.mrb[0].mxu0 %v229
    %v297 = vpop.f32.mrb[0].mxu0
    %v298 = vadd.f32 0.0, %v297
    %v299 = vpop.f32.mrb[0].mxu0
    %300 = vdwg.mxu0
    %v301 = vmax.f32 %v135, %v136
    %302 = vmax.xlane.f32.xlu0 %v301
    %v303 = vpop.xlane.xlu0 %302
    %v304 = vsub.f32 %v135, %v303
    %v305 = vsub.f32 %v136, %v303
    %v306 = vmul.f32 %v304, 1.442695
    %v307 = vpow.pop %v306
    %v308 = vmul.f32 %v305, 1.442695
    %v309 = vpow.pop %v308
    %v310 = vadd.f32 %v307, %v309
    %311 = vadd.xlane.f32.xlu0 %v310
    %v312 = vpop.xlane.xlu0 %311
    %v313 = vrcp.pop %v312
    %v314 = vmul.f32 %v307, %v313
    %v315 = vmul.f32 %v309, %v313
    %316 = vmatprep.subr.mxu0 0.0
    %317 = vmatpush1.msra.mxu0 %v171
    %318 = vmatprep.subr.mxu0 0.0
    %319 = vmatpush1.msra.mxu0 %v172
    %320 = vmatprep.subr.mxu0 0.0
    %321 = vmatpush1.msra.mxu0 %v173
    %322 = vmatprep.subr.mxu0 0.0
    %323 = vmatpush1.msra.mxu0 %v174
    %324 = vmatprep.subr.mxu0 0.0
    %325 = vmatpush1.msra.mxu0 %v175
    %326 = vmatprep.subr.mxu0 0.0
    %327 = vmatpush1.msra.mxu0 %v176
    %328 = vmatprep.subr.mxu0 0.0
    %329 = vmatpush1.msra.mxu0 %v177
    %330 = vmatprep.subr.mxu0 0.0
    %331 = vmatpush1.msra.mxu0 %v178
    %332 = vmatprep.subr.mxu0 0.0
    %333 = vmatpush1.msra.mxu0 %v179
    %334 = vmatprep.subr.mxu0 0.0
    %335 = vmatpush1.msra.mxu0 %v180
    %336 = vmatprep.subr.mxu0 0.0
    %337 = vmatpush1.msra.mxu0 %v181
    %338 = vmatprep.subr.mxu0 0.0
    %339 = vmatpush1.msra.mxu0 %v182
    %340 = vmatprep.subr.mxu0 0.0
    %341 = vmatpush1.msra.mxu0 %v183
    %342 = vmatprep.subr.mxu0 0.0
    %343 = vmatpush1.msra.mxu0 %v184
    %344 = vmatprep.subr.mxu0 0.0
    %345 = vmatpush1.msra.mxu0 %v185
    %346 = vmatprep.subr.mxu0 0.0
    %347 = vmatpush1.msra.mxu0 %v186
    %348 = vmatprep.subr.mxu0 0.0
    %349 = vmatpush1.msra.mxu0 %v187
    %350 = vmatprep.subr.mxu0 0.0
    %351 = vmatpush1.msra.mxu0 %v188
    %352 = vmatprep.subr.mxu0 0.0
    %353 = vmatpush1.msra.mxu0 %v189
    %354 = vmatprep.subr.mxu0 0.0
    %355 = vmatpush1.msra.mxu0 %v190
    %356 = vmatprep.subr.mxu0 0.0
    %357 = vmatpush1.msra.mxu0 %v191
    %358 = vmatprep.subr.mxu0 0.0
    %359 = vmatpush1.msra.mxu0 %v192
    %360 = vmatprep.subr.mxu0 0.0
    %361 = vmatpush1.msra.mxu0 %v193
    %362 = vmatprep.subr.mxu0 0.0
    %363 = vmatpush1.msra.mxu0 %v194
    %364 = vmatprep.subr.mxu0 0.0
    %365 = vmatpush1.msra.mxu0 %v195
    %366 = vmatprep.subr.mxu0 0.0
    %367 = vmatpush1.msra.mxu0 %v196
    %368 = vmatprep.subr.mxu0 0.0
    %369 = vmatpush1.msra.mxu0 %v197
    %370 = vmatprep.subr.mxu0 0.0
    %371 = vmatpush1.msra.mxu0 %v198
    %372 = vmatprep.subr.mxu0 0.0
    %373 = vmatpush1.msra.mxu0 %v199
    %374 = vmatprep.subr.mxu0 0.0
    %375 = vmatpush1.msra.mxu0 %v200
    %376 = vmatprep.subr.mxu0 0.0
    %377 = vmatpush1.msra.mxu0 %v201
    %378 = vmatprep.subr.mxu0 0.0
    %379 = vmatpush1.msra.mxu0 %v202
    %380 = vmatprep.mubr.f32.mxu0 %v315
    %381 = vmatmul.mubr.f32.gmra.mrb[0].mxu0 %v314
    %v382 = vpop.f32.mrb[0].mxu0
    %v383 = vadd.f32 0.0, %v382
    %v384 = vpop.f32.mrb[0].mxu0
    %385 = vdwg.mxu0
    %vm386 = vcmask 261120
    %v388 = vsel %vm386, %v298, 0
    %390 = vmatprep.subr.mxu0 %v52
    %391 = vmatpush1.msra.mxu0 %v51
    %392 = vmatprep.subr.mxu0 %v54
    %393 = vmatpush1.msra.mxu0 %v53
    %394 = vmatprep.subr.mxu0 %v56
    %395 = vmatpush1.msra.mxu0 %v55
    %396 = vmatprep.subr.mxu0 %v58
    %397 = vmatpush1.msra.mxu0 %v57
    %398 = vmatprep.subr.mxu0 0.0
    %399 = vmatpush1.msra.mxu0 0.0
    %400 = vmatprep.subr.mxu0 0.0
    %401 = vmatpush1.msra.mxu0 0.0
    %402 = vmatprep.subr.mxu0 0.0
    %403 = vmatpush1.msra.mxu0 0.0
    %404 = vmatprep.subr.mxu0 0.0
    %405 = vmatpush1.msra.mxu0 0.0
    %406 = vmatprep.subr.mxu0 0.0
    %407 = vmatpush1.msra.mxu0 0.0
    %408 = vmatprep.subr.mxu0 0.0
    %409 = vmatpush1.msra.mxu0 0.0
    %410 = vmatprep.subr.mxu0 0.0
    %411 = vmatpush1.msra.mxu0 0.0
    %412 = vmatprep.subr.mxu0 0.0
    %413 = vmatpush1.msra.mxu0 0.0
    %414 = vmatprep.subr.mxu0 0.0
    %415 = vmatpush1.msra.mxu0 0.0
    %416 = vmatprep.subr.mxu0 0.0
    %417 = vmatpush1.msra.mxu0 0.0
    %418 = vmatprep.subr.mxu0 0.0
    %419 = vmatpush1.msra.mxu0 0.0
    %420 = vmatprep.subr.mxu0 0.0
    %421 = vmatpush1.msra.mxu0 0.0
    %422 = vmatprep.subr.mxu0 0.0
    %423 = vmatpush1.msra.mxu0 0.0
    %424 = vmatprep.subr.mxu0 0.0
    %425 = vmatpush1.msra.mxu0 0.0
    %426 = vmatprep.subr.mxu0 0.0
    %427 = vmatpush1.msra.mxu0 0.0
    %428 = vmatprep.subr.mxu0 0.0
    %429 = vmatpush1.msra.mxu0 0.0
    %430 = vmatprep.subr.mxu0 0.0
    %431 = vmatpush1.msra.mxu0 0.0
    %432 = vmatprep.subr.mxu0 0.0
    %433 = vmatpush1.msra.mxu0 0.0
    %434 = vmatprep.subr.mxu0 0.0
    %435 = vmatpush1.msra.mxu0 0.0
    %436 = vmatprep.subr.mxu0 0.0
    %437 = vmatpush1.msra.mxu0 0.0
    %438 = vmatprep.subr.mxu0 0.0
    %439 = vmatpush1.msra.mxu0 0.0
    %440 = vmatprep.subr.mxu0 0.0
    %441 = vmatpush1.msra.mxu0 0.0
    %442 = vmatprep.subr.mxu0 0.0
    %443 = vmatpush1.msra.mxu0 0.0
    %444 = vmatprep.subr.mxu0 0.0
    %445 = vmatpush1.msra.mxu0 0.0
    %446 = vmatprep.subr.mxu0 0.0
    %447 = vmatpush1.msra.mxu0 0.0
    %448 = vmatprep.subr.mxu0 0.0
    %449 = vmatpush1.msra.mxu0 0.0
    %450 = vmatprep.subr.mxu0 0.0
    %451 = vmatpush1.msra.mxu0 0.0
    %452 = vmatprep.subr.mxu0 0.0
    %453 = vmatpush1.msra.mxu0 0.0
    %454 = vmatprep.mubr.f32.mxu0 0.0
    %455 = vmatmul.mubr.f32.gmra.mrb[0].mxu0 %v388
    %v456 = vpop.f32.mrb[0].mxu0
    %v457 = vadd.f32 0.0, %v456
    %v458 = vpop.f32.mrb[0].mxu0
    %v459 = vadd.f32 0.0, %v458
    %460 = vdwg.mxu0
    %v462 = vsel %vm386, %v383, 0
    %464 = vmatprep.subr.mxu0 0.0
    %465 = vmatpush1.msra.mxu0 %v63
    %466 = vmatprep.subr.mxu0 0.0
    %467 = vmatpush1.msra.mxu0 %v64
    %468 = vmatprep.subr.mxu0 0.0
    %469 = vmatpush1.msra.mxu0 %v65
    %470 = vmatprep.subr.mxu0 0.0
    %471 = vmatpush1.msra.mxu0 %v66
    %472 = vmatprep.subr.mxu0 0.0
    %473 = vmatpush1.msra.mxu0 0.0
    %474 = vmatprep.subr.mxu0 0.0
    %475 = vmatpush1.msra.mxu0 0.0
    %476 = vmatprep.subr.mxu0 0.0
    %477 = vmatpush1.msra.mxu0 0.0
    %478 = vmatprep.subr.mxu0 0.0
    %479 = vmatpush1.msra.mxu0 0.0
    %480 = vmatprep.subr.mxu0 0.0
    %481 = vmatpush1.msra.mxu0 0.0
    %482 = vmatprep.subr.mxu0 0.0
    %483 = vmatpush1.msra.mxu0 0.0
    %484 = vmatprep.subr.mxu0 0.0
    %485 = vmatpush1.msra.mxu0 0.0
    %486 = vmatprep.subr.mxu0 0.0
    %487 = vmatpush1.msra.mxu0 0.0
    %488 = vmatprep.subr.mxu0 0.0
    %489 = vmatpush1.msra.mxu0 0.0
    %490 = vmatprep.subr.mxu0 0.0
    %491 = vmatpush1.msra.mxu0 0.0
    %492 = vmatprep.subr.mxu0 0.0
    %493 = vmatpush1.msra.mxu0 0.0
    %494 = vmatprep.subr.mxu0 0.0
    %495 = vmatpush1.msra.mxu0 0.0
    %496 = vmatprep.subr.mxu0 0.0
    %497 = vmatpush1.msra.mxu0 0.0
    %498 = vmatprep.subr.mxu0 0.0
    %499 = vmatpush1.msra.mxu0 0.0
    %500 = vmatprep.subr.mxu0 0.0
    %501 = vmatpush1.msra.mxu0 0.0
    %502 = vmatprep.subr.mxu0 0.0
    %503 = vmatpush1.msra.mxu0 0.0
    %504 = vmatprep.subr.mxu0 0.0
    %505 = vmatpush1.msra.mxu0 0.0
    %506 = vmatprep.subr.mxu0 0.0
    %507 = vmatpush1.msra.mxu0 0.0
    %508 = vmatprep.subr.mxu0 0.0
    %509 = vmatpush1.msra.mxu0 0.0
    %510 = vmatprep.subr.mxu0 0.0
    %511 = vmatpush1.msra.mxu0 0.0
    %512 = vmatprep.subr.mxu0 0.0
    %513 = vmatpush1.msra.mxu0 0.0
    %514 = vmatprep.subr.mxu0 0.0
    %515 = vmatpush1.msra.mxu0 0.0
    %516 = vmatprep.subr.mxu0 0.0
    %517 = vmatpush1.msra.mxu0 0.0
    %518 = vmatprep.subr.mxu0 0.0
    %519 = vmatpush1.msra.mxu0 0.0
    %520 = vmatprep.subr.mxu0 0.0
    %521 = vmatpush1.msra.mxu0 0.0
    %522 = vmatprep.subr.mxu0 0.0
    %523 = vmatpush1.msra.mxu0 0.0
    %524 = vmatprep.subr.mxu0 0.0
    %525 = vmatpush1.msra.mxu0 0.0
    %526 = vmatprep.subr.mxu0 0.0
    %527 = vmatpush1.msra.mxu0 0.0
    %528 = vmatprep.mubr.f32.mxu0 0.0
    %529 = vmatmul.mubr.f32.gmra.mrb[0].mxu0 %v462
    %v530 = vpop.f32.mrb[0].mxu0
    %v531 = vadd.f32 0.0, %v530
    %v532 = vpop.f32.mrb[0].mxu0
    %533 = vdwg.mxu0
    %v534 = vadd.f32 %v457, %v531
    %v535 = vlaneseq
    %v536 = vshrl.u32 %v535, 7
    %v537 = vsub.s32 0, %v536
    %v538 = vrot.slane %v132, %v537
    %v539 = vadd.f32 %v534, %v538
    %v540 = vxor.u32 %v539, 2147483648
    %v541 = vmul.f32 %v540, 1.442695
    %v542 = vpow.pop %v541
    %v543 = vadd.f32 %v542, 1.0
    %v544 = vrcp.pop %v543
    %v545 = vmul.f32 1.0, %v544
    %v546 = vmul.f32 %v545, %v298
    %v547 = vsub.f32 1.0, %v545
    %v548 = vmul.f32 %v547, %v383
    %v549 = vadd.f32 %v546, %v548
    %v551 = vsel %vm386, %v549, 0
    %553 = vmatprep.subr.mxu0 0.0
    %554 = vmatpush1.msra.mxu0 %v71
    %555 = vmatprep.subr.mxu0 0.0
    %556 = vmatpush1.msra.mxu0 %v72
    %557 = vmatprep.subr.mxu0 0.0
    %558 = vmatpush1.msra.mxu0 %v73
    %559 = vmatprep.subr.mxu0 0.0
    %560 = vmatpush1.msra.mxu0 %v74
    %561 = vmatprep.subr.mxu0 0.0
    %562 = vmatpush1.msra.mxu0 0.0
    %563 = vmatprep.subr.mxu0 0.0
    %564 = vmatpush1.msra.mxu0 0.0
    %565 = vmatprep.subr.mxu0 0.0
    %566 = vmatpush1.msra.mxu0 0.0
    %567 = vmatprep.subr.mxu0 0.0
    %568 = vmatpush1.msra.mxu0 0.0
    %569 = vmatprep.subr.mxu0 0.0
    %570 = vmatpush1.msra.mxu0 0.0
    %571 = vmatprep.subr.mxu0 0.0
    %572 = vmatpush1.msra.mxu0 0.0
    %573 = vmatprep.subr.mxu0 0.0
    %574 = vmatpush1.msra.mxu0 0.0
    %575 = vmatprep.subr.mxu0 0.0
    %576 = vmatpush1.msra.mxu0 0.0
    %577 = vmatprep.subr.mxu0 0.0
    %578 = vmatpush1.msra.mxu0 0.0
    %579 = vmatprep.subr.mxu0 0.0
    %580 = vmatpush1.msra.mxu0 0.0
    %581 = vmatprep.subr.mxu0 0.0
    %582 = vmatpush1.msra.mxu0 0.0
    %583 = vmatprep.subr.mxu0 0.0
    %584 = vmatpush1.msra.mxu0 0.0
    %585 = vmatprep.subr.mxu0 0.0
    %586 = vmatpush1.msra.mxu0 0.0
    %587 = vmatprep.subr.mxu0 0.0
    %588 = vmatpush1.msra.mxu0 0.0
    %589 = vmatprep.subr.mxu0 0.0
    %590 = vmatpush1.msra.mxu0 0.0
    %591 = vmatprep.subr.mxu0 0.0
    %592 = vmatpush1.msra.mxu0 0.0
    %593 = vmatprep.subr.mxu0 0.0
    %594 = vmatpush1.msra.mxu0 0.0
    %595 = vmatprep.subr.mxu0 0.0
    %596 = vmatpush1.msra.mxu0 0.0
    %597 = vmatprep.subr.mxu0 0.0
    %598 = vmatpush1.msra.mxu0 0.0
    %599 = vmatprep.subr.mxu0 0.0
    %600 = vmatpush1.msra.mxu0 0.0
    %601 = vmatprep.subr.mxu0 0.0
    %602 = vmatpush1.msra.mxu0 0.0
    %603 = vmatprep.subr.mxu0 0.0
    %604 = vmatpush1.msra.mxu0 0.0
    %605 = vmatprep.subr.mxu0 0.0
    %606 = vmatpush1.msra.mxu0 0.0
    %607 = vmatprep.subr.mxu0 0.0
    %608 = vmatpush1.msra.mxu0 0.0
    %609 = vmatprep.subr.mxu0 0.0
    %610 = vmatpush1.msra.mxu0 0.0
    %611 = vmatprep.subr.mxu0 0.0
    %612 = vmatpush1.msra.mxu0 0.0
    %613 = vmatprep.subr.mxu0 0.0
    %614 = vmatpush1.msra.mxu0 0.0
    %615 = vmatprep.subr.mxu0 0.0
    %616 = vmatpush1.msra.mxu0 0.0
    %617 = vmatprep.mubr.f32.mxu0 0.0
    %618 = vmatmul.mubr.f32.gmra.mrb[0].mxu0 %v551
    %v619 = vpop.f32.mrb[0].mxu0
    %v620 = vadd.f32 0.0, %v619
    %v621 = vpop.f32.mrb[0].mxu0
    %622 = vdwg.mxu0
    %v623 = vadd.f32 %v459, %v620
    %v625 = vsel %vm386, %v137, 0
    %627 = vmatprep.subr.mxu0 0.0
    %628 = vmatpush1.msra.mxu0 %v79
    %629 = vmatprep.subr.mxu0 0.0
    %630 = vmatpush1.msra.mxu0 %v80
    %631 = vmatprep.subr.mxu0 0.0
    %632 = vmatpush1.msra.mxu0 %v81
    %633 = vmatprep.subr.mxu0 0.0
    %634 = vmatpush1.msra.mxu0 %v82
    %635 = vmatprep.subr.mxu0 0.0
    %636 = vmatpush1.msra.mxu0 0.0
    %637 = vmatprep.subr.mxu0 0.0
    %638 = vmatpush1.msra.mxu0 0.0
    %639 = vmatprep.subr.mxu0 0.0
    %640 = vmatpush1.msra.mxu0 0.0
    %641 = vmatprep.subr.mxu0 0.0
    %642 = vmatpush1.msra.mxu0 0.0
    %643 = vmatprep.subr.mxu0 0.0
    %644 = vmatpush1.msra.mxu0 0.0
    %645 = vmatprep.subr.mxu0 0.0
    %646 = vmatpush1.msra.mxu0 0.0
    %647 = vmatprep.subr.mxu0 0.0
    %648 = vmatpush1.msra.mxu0 0.0
    %649 = vmatprep.subr.mxu0 0.0
    %650 = vmatpush1.msra.mxu0 0.0
    %651 = vmatprep.subr.mxu0 0.0
    %652 = vmatpush1.msra.mxu0 0.0
    %653 = vmatprep.subr.mxu0 0.0
    %654 = vmatpush1.msra.mxu0 0.0
    %655 = vmatprep.subr.mxu0 0.0
    %656 = vmatpush1.msra.mxu0 0.0
    %657 = vmatprep.subr.mxu0 0.0
    %658 = vmatpush1.msra.mxu0 0.0
    %659 = vmatprep.subr.mxu0 0.0
    %660 = vmatpush1.msra.mxu0 0.0
    %661 = vmatprep.subr.mxu0 0.0
    %662 = vmatpush1.msra.mxu0 0.0
    %663 = vmatprep.subr.mxu0 0.0
    %664 = vmatpush1.msra.mxu0 0.0
    %665 = vmatprep.subr.mxu0 0.0
    %666 = vmatpush1.msra.mxu0 0.0
    %667 = vmatprep.subr.mxu0 0.0
    %668 = vmatpush1.msra.mxu0 0.0
    %669 = vmatprep.subr.mxu0 0.0
    %670 = vmatpush1.msra.mxu0 0.0
    %671 = vmatprep.subr.mxu0 0.0
    %672 = vmatpush1.msra.mxu0 0.0
    %673 = vmatprep.subr.mxu0 0.0
    %674 = vmatpush1.msra.mxu0 0.0
    %675 = vmatprep.subr.mxu0 0.0
    %676 = vmatpush1.msra.mxu0 0.0
    %677 = vmatprep.subr.mxu0 0.0
    %678 = vmatpush1.msra.mxu0 0.0
    %679 = vmatprep.subr.mxu0 0.0
    %680 = vmatpush1.msra.mxu0 0.0
    %681 = vmatprep.subr.mxu0 0.0
    %682 = vmatpush1.msra.mxu0 0.0
    %683 = vmatprep.subr.mxu0 0.0
    %684 = vmatpush1.msra.mxu0 0.0
    %685 = vmatprep.subr.mxu0 0.0
    %686 = vmatpush1.msra.mxu0 0.0
    %687 = vmatprep.subr.mxu0 0.0
    %688 = vmatpush1.msra.mxu0 0.0
    %689 = vmatprep.subr.mxu0 0.0
    %690 = vmatpush1.msra.mxu0 0.0
    %691 = vmatprep.mubr.f32.mxu0 0.0
    %692 = vmatmul.mubr.f32.gmra.mrb[0].mxu0 %v625
    %v693 = vpop.f32.mrb[0].mxu0
    %v694 = vadd.f32 0.0, %v693
    %v695 = vpop.f32.mrb[0].mxu0
    %696 = vdwg.mxu0
    %v697 = vadd.f32 %v623, %v694
    %v698 = vlaneseq
    %v699 = vshrl.u32 %v698, 7
    %v700 = vsub.s32 1, %v699
    %v701 = vrot.slane %v132, %v700
    %v702 = vadd.f32 %v697, %v701
    %v703 = vxor.u32 %v702, 2147483648
    %v704 = vmul.f32 %v703, 1.442695
    %v705 = vpow.pop %v704
    %v706 = vadd.f32 %v705, 1.0
    %v707 = vrcp.pop %v706
    %v708 = vmul.f32 1.0, %v707
    %v709 = vtanh.pop %v702
    %711 = vrot.lane.b32.xlu0 %v138, 32
    %v712 = vpop.permute.xlu0 %711
    %v714 = vmul.f32 %v708, %v712
    %716 = vrot.lane.b32.xlu0 %v709, 64
    %v717 = vpop.permute.xlu0 %716
    %v719 = vmul.f32 %v708, %v717
    %721 = vrot.lane.b32.xlu0 %v719, 32
    %v722 = vpop.permute.xlu0 %721
    %v724 = vadd.f32 %v714, %v722
    %v725 = vtanh.pop %v724
    %727 = vrot.lane.b32.xlu0 %v725, 64
    %v728 = vpop.permute.xlu0 %727
    %v730 = vmul.f32 %v708, %v728
    %732 = vrot.lane.b32.xlu0 %v730, 32
    %v733 = vpop.permute.xlu0 %732
    %v734 = vsel %vm386, %v733, 0
    %736 = vmatprep.subr.mxu0 %v96
    %737 = vmatpush1.msra.mxu0 %v95
    %738 = vmatprep.subr.mxu0 %v98
    %739 = vmatpush1.msra.mxu0 %v97
    %740 = vmatprep.subr.mxu0 %v100
    %741 = vmatpush1.msra.mxu0 %v99
    %742 = vmatprep.subr.mxu0 %v102
    %743 = vmatpush1.msra.mxu0 %v101
    %744 = vmatprep.subr.mxu0 0.0
    %745 = vmatpush1.msra.mxu0 0.0
    %746 = vmatprep.subr.mxu0 0.0
    %747 = vmatpush1.msra.mxu0 0.0
    %748 = vmatprep.subr.mxu0 0.0
    %749 = vmatpush1.msra.mxu0 0.0
    %750 = vmatprep.subr.mxu0 0.0
    %751 = vmatpush1.msra.mxu0 0.0
    %752 = vmatprep.subr.mxu0 0.0
    %753 = vmatpush1.msra.mxu0 0.0
    %754 = vmatprep.subr.mxu0 0.0
    %755 = vmatpush1.msra.mxu0 0.0
    %756 = vmatprep.subr.mxu0 0.0
    %757 = vmatpush1.msra.mxu0 0.0
    %758 = vmatprep.subr.mxu0 0.0
    %759 = vmatpush1.msra.mxu0 0.0
    %760 = vmatprep.subr.mxu0 0.0
    %761 = vmatpush1.msra.mxu0 0.0
    %762 = vmatprep.subr.mxu0 0.0
    %763 = vmatpush1.msra.mxu0 0.0
    %764 = vmatprep.subr.mxu0 0.0
    %765 = vmatpush1.msra.mxu0 0.0
    %766 = vmatprep.subr.mxu0 0.0
    %767 = vmatpush1.msra.mxu0 0.0
    %768 = vmatprep.subr.mxu0 0.0
    %769 = vmatpush1.msra.mxu0 0.0
    %770 = vmatprep.subr.mxu0 0.0
    %771 = vmatpush1.msra.mxu0 0.0
    %772 = vmatprep.subr.mxu0 0.0
    %773 = vmatpush1.msra.mxu0 0.0
    %774 = vmatprep.subr.mxu0 0.0
    %775 = vmatpush1.msra.mxu0 0.0
    %776 = vmatprep.subr.mxu0 0.0
    %777 = vmatpush1.msra.mxu0 0.0
    %778 = vmatprep.subr.mxu0 0.0
    %779 = vmatpush1.msra.mxu0 0.0
    %780 = vmatprep.subr.mxu0 0.0
    %781 = vmatpush1.msra.mxu0 0.0
    %782 = vmatprep.subr.mxu0 0.0
    %783 = vmatpush1.msra.mxu0 0.0
    %784 = vmatprep.subr.mxu0 0.0
    %785 = vmatpush1.msra.mxu0 0.0
    %786 = vmatprep.subr.mxu0 0.0
    %787 = vmatpush1.msra.mxu0 0.0
    %788 = vmatprep.subr.mxu0 0.0
    %789 = vmatpush1.msra.mxu0 0.0
    %790 = vmatprep.subr.mxu0 0.0
    %791 = vmatpush1.msra.mxu0 0.0
    %792 = vmatprep.subr.mxu0 0.0
    %793 = vmatpush1.msra.mxu0 0.0
    %794 = vmatprep.subr.mxu0 0.0
    %795 = vmatpush1.msra.mxu0 0.0
    %796 = vmatprep.subr.mxu0 0.0
    %797 = vmatpush1.msra.mxu0 0.0
    %798 = vmatprep.subr.mxu0 0.0
    %799 = vmatpush1.msra.mxu0 0.0
    %800 = vmatprep.mubr.f32.mxu0 0.0
    %801 = vmatmul.mubr.f32.gmra.mrb[0].mxu0 %v734
    %v802 = vpop.f32.mrb[0].mxu0
    %v803 = vadd.f32 0.0, %v802
    %v804 = vpop.f32.mrb[0].mxu0
    %v805 = vadd.f32 0.0, %v804
    %806 = vdwg.mxu0
    %v807 = vlaneseq
    %v808 = vshrl.u32 %v807, 7
    %v809 = vsub.s32 2, %v808
    %v810 = vrot.slane %v132, %v809
    %v811 = vadd.f32 %v803, %v810
    %vm812 = vcmp.gt.f32.partialorder %v811, 0.0
    %v813 = vmul.f32 %v811, 1.442695
    %v814 = vpow.pop %v813
    %v815 = vsub.f32 %v814, 1.0
    %v816 = vmul.f32 %v815, 1.6732632
    %v817 = vsel %vm812, %v811, %v816
    %v818 = vmul.f32 %v817, 1.050701
    %v819 = vlaneseq
    %v820 = vshrl.u32 %v819, 7
    %v821 = vsub.s32 3, %v820
    %v822 = vrot.slane %v132, %v821
    %v824 = vsel %vm386, %v818, 0
    %826 = vmatprep.subr.mxu0 0.0
    %827 = vmatpush1.msra.mxu0 %v87
    %828 = vmatprep.subr.mxu0 0.0
    %829 = vmatpush1.msra.mxu0 %v88
    %830 = vmatprep.subr.mxu0 0.0
    %831 = vmatpush1.msra.mxu0 %v89
    %832 = vmatprep.subr.mxu0 0.0
    %833 = vmatpush1.msra.mxu0 %v90
    %834 = vmatprep.subr.mxu0 0.0
    %835 = vmatpush1.msra.mxu0 0.0
    %836 = vmatprep.subr.mxu0 0.0
    %837 = vmatpush1.msra.mxu0 0.0
    %838 = vmatprep.subr.mxu0 0.0
    %839 = vmatpush1.msra.mxu0 0.0
    %840 = vmatprep.subr.mxu0 0.0
    %841 = vmatpush1.msra.mxu0 0.0
    %842 = vmatprep.subr.mxu0 0.0
    %843 = vmatpush1.msra.mxu0 0.0
    %844 = vmatprep.subr.mxu0 0.0
    %845 = vmatpush1.msra.mxu0 0.0
    %846 = vmatprep.subr.mxu0 0.0
    %847 = vmatpush1.msra.mxu0 0.0
    %848 = vmatprep.subr.mxu0 0.0
    %849 = vmatpush1.msra.mxu0 0.0
    %850 = vmatprep.subr.mxu0 0.0
    %851 = vmatpush1.msra.mxu0 0.0
    %852 = vmatprep.subr.mxu0 0.0
    %853 = vmatpush1.msra.mxu0 0.0
    %854 = vmatprep.subr.mxu0 0.0
    %855 = vmatpush1.msra.mxu0 0.0
    %856 = vmatprep.subr.mxu0 0.0
    %857 = vmatpush1.msra.mxu0 0.0
    %858 = vmatprep.subr.mxu0 0.0
    %859 = vmatpush1.msra.mxu0 0.0
    %860 = vmatprep.subr.mxu0 0.0
    %861 = vmatpush1.msra.mxu0 0.0
    %862 = vmatprep.subr.mxu0 0.0
    %863 = vmatpush1.msra.mxu0 0.0
    %864 = vmatprep.subr.mxu0 0.0
    %865 = vmatpush1.msra.mxu0 0.0
    %866 = vmatprep.subr.mxu0 0.0
    %867 = vmatpush1.msra.mxu0 0.0
    %868 = vmatprep.subr.mxu0 0.0
    %869 = vmatpush1.msra.mxu0 0.0
    %870 = vmatprep.subr.mxu0 0.0
    %871 = vmatpush1.msra.mxu0 0.0
    %872 = vmatprep.subr.mxu0 0.0
    %873 = vmatpush1.msra.mxu0 0.0
    %874 = vmatprep.subr.mxu0 0.0
    %875 = vmatpush1.msra.mxu0 0.0
    %876 = vmatprep.subr.mxu0 0.0
    %877 = vmatpush1.msra.mxu0 0.0
    %878 = vmatprep.subr.mxu0 0.0
    %879 = vmatpush1.msra.mxu0 0.0
    %880 = vmatprep.subr.mxu0 0.0
    %881 = vmatpush1.msra.mxu0 0.0
    %882 = vmatprep.subr.mxu0 0.0
    %883 = vmatpush1.msra.mxu0 0.0
    %884 = vmatprep.subr.mxu0 0.0
    %885 = vmatpush1.msra.mxu0 0.0
    %886 = vmatprep.subr.mxu0 0.0
    %887 = vmatpush1.msra.mxu0 0.0
    %888 = vmatprep.subr.mxu0 0.0
    %889 = vmatpush1.msra.mxu0 0.0
    %890 = vmatprep.mubr.f32.mxu0 0.0
    %891 = vmatmul.mubr.f32.gmra.mrb[0].mxu0 %v824
    %v892 = vpop.f32.mrb[0].mxu0
    %v893 = vadd.f32 %v822, %v892
    %v894 = vpop.f32.mrb[0].mxu0
    %895 = vdwg.mxu0
    %vm896 = vcmp.gt.f32.partialorder %v893, 0.0
    %v897 = vmul.f32 %v893, 1.442695
    %v898 = vpow.pop %v897
    %v899 = vsub.f32 %v898, 1.0
    %v900 = vmul.f32 %v899, 1.6732632
    %v901 = vsel %vm896, %v893, %v900
    %v902 = vmul.f32 %v901, 1.050701
    %v904 = vcombine.high %v902, %v902
    %v906 = vunpack.c.l.s4 1966171168
    %v907 = vunpack.c.0.s8 %v906
    %v908 = vlaneseq
    %v909 = vshrl.u32 %v908, 7
    %v910 = vsub.s32 %v907, %v909
    %v911 = vrot.slane %v902, %v910
    %v913 = vunpack.c.l.s4 1966171168
    %v914 = vunpack.c.0.s8 %v913
    %v915 = vlaneseq
    %v916 = vshrl.u32 %v915, 7
    %v917 = vsub.s32 %v914, %v916
    %v918 = vrot.slane %v904, %v917
    %v919 = vcombine.high %v911, %v911
    %v920 = vcombine.high %v918, %v918
    %v922 = vunpack.c.l.s4 1966171168
    %v923 = vunpack.c.0.s8 %v922
    %v924 = vlaneseq
    %v925 = vshrl.u32 %v924, 7
    %v926 = vsub.s32 %v923, %v925
    %v927 = vrot.slane %v911, %v926
    %v929 = vunpack.c.l.s4 1966171168
    %v930 = vunpack.c.0.s8 %v929
    %v931 = vlaneseq
    %v932 = vshrl.u32 %v931, 7
    %v933 = vsub.s32 %v930, %v932
    %v934 = vrot.slane %v918, %v933
    %v936 = vunpack.c.l.s4 1966171168
    %v937 = vunpack.c.0.s8 %v936
    %v938 = vlaneseq
    %v939 = vshrl.u32 %v938, 7
    %v940 = vsub.s32 %v937, %v939
    %v941 = vrot.slane %v919, %v940
    %v943 = vunpack.c.l.s4 1966171168
    %v944 = vunpack.c.0.s8 %v943
    %v945 = vlaneseq
    %v946 = vshrl.u32 %v945, 7
    %v947 = vsub.s32 %v944, %v946
    %v948 = vrot.slane %v920, %v947
    %v949 = vcombine.high %v927, %v927
    %v950 = vcombine.high %v934, %v934
    %v951 = vcombine.high %v941, %v941
    %v952 = vcombine.high %v948, %v948
    %v953 = vlaneseq
    %v954 = vshrl.u32 %v953, 7
    %v955 = vsub.s32 0, %v954
    %v956 = vrot.slane %v927, %v955
    %v957 = vlaneseq
    %v958 = vshrl.u32 %v957, 7
    %v959 = vsub.s32 0, %v958
    %v960 = vrot.slane %v941, %v959
    %v961 = vlaneseq
    %v962 = vshrl.u32 %v961, 7
    %v963 = vsub.s32 0, %v962
    %v964 = vrot.slane %v949, %v963
    %v965 = vlaneseq
    %v966 = vshrl.u32 %v965, 7
    %v967 = vsub.s32 0, %v966
    %v968 = vrot.slane %v951, %v967
    %v969 = vlaneseq
    %v970 = vshrl.u32 %v969, 7
    %v971 = vsub.s32 0, %v970
    %v972 = vrot.slane %v934, %v971
    %v973 = vlaneseq
    %v974 = vshrl.u32 %v973, 7
    %v975 = vsub.s32 0, %v974
    %v976 = vrot.slane %v948, %v975
    %v977 = vlaneseq
    %v978 = vshrl.u32 %v977, 7
    %v979 = vsub.s32 0, %v978
    %v980 = vrot.slane %v950, %v979
    %v981 = vlaneseq
    %v982 = vshrl.u32 %v981, 7
    %v983 = vsub.s32 0, %v982
    %v984 = vrot.slane %v952, %v983
    %v993 = vmul.f32 %v203, %v956
    %v994 = vmul.f32 %v204, %v956
    %v995 = vmul.f32 %v205, %v960
    %v996 = vmul.f32 %v206, %v960
    %v997 = vmul.f32 %v207, %v964
    %v998 = vmul.f32 %v208, %v964
    %v999 = vmul.f32 %v209, %v968
    %v1000 = vmul.f32 %v210, %v968
    %v1001 = vmul.f32 %v211, %v972
    %v1002 = vmul.f32 %v212, %v972
    %v1003 = vmul.f32 %v213, %v976
    %v1004 = vmul.f32 %v214, %v976
    %v1005 = vmul.f32 %v215, %v980
    %v1006 = vmul.f32 %v216, %v980
    %v1007 = vmul.f32 %v217, %v984
    %v1008 = vmul.f32 %v218, %v984
    %v1009 = vsel %vm386, %v993, 0.0
    %1010 = vadd.xlane.f32.xlu0 %v1009
    %v1011 = vpop.xlane.xlu0 %1010
    %v1012 = vsel %vm386, %v994, 0.0
    %1013 = vadd.xlane.f32.xlu0 %v1012
    %v1014 = vpop.xlane.xlu0 %1013
    %v1015 = vsel %vm386, %v995, 0.0
    %1016 = vadd.xlane.f32.xlu0 %v1015
    %v1017 = vpop.xlane.xlu0 %1016
    %v1018 = vsel %vm386, %v996, 0.0
    %1019 = vadd.xlane.f32.xlu0 %v1018
    %v1020 = vpop.xlane.xlu0 %1019
    %v1021 = vsel %vm386, %v997, 0.0
    %1022 = vadd.xlane.f32.xlu0 %v1021
    %v1023 = vpop.xlane.xlu0 %1022
    %v1024 = vsel %vm386, %v998, 0.0
    %1025 = vadd.xlane.f32.xlu0 %v1024
    %v1026 = vpop.xlane.xlu0 %1025
    %v1027 = vsel %vm386, %v999, 0.0
    %1028 = vadd.xlane.f32.xlu0 %v1027
    %v1029 = vpop.xlane.xlu0 %1028
    %v1030 = vsel %vm386, %v1000, 0.0
    %1031 = vadd.xlane.f32.xlu0 %v1030
    %v1032 = vpop.xlane.xlu0 %1031
    %v1033 = vsel %vm386, %v1001, 0.0
    %1034 = vadd.xlane.f32.xlu0 %v1033
    %v1035 = vpop.xlane.xlu0 %1034
    %v1036 = vsel %vm386, %v1002, 0.0
    %1037 = vadd.xlane.f32.xlu0 %v1036
    %v1038 = vpop.xlane.xlu0 %1037
    %v1039 = vsel %vm386, %v1003, 0.0
    %1040 = vadd.xlane.f32.xlu0 %v1039
    %v1041 = vpop.xlane.xlu0 %1040
    %v1042 = vsel %vm386, %v1004, 0.0
    %1043 = vadd.xlane.f32.xlu0 %v1042
    %v1044 = vpop.xlane.xlu0 %1043
    %v1045 = vsel %vm386, %v1005, 0.0
    %1046 = vadd.xlane.f32.xlu0 %v1045
    %v1047 = vpop.xlane.xlu0 %1046
    %v1048 = vsel %vm386, %v1006, 0.0
    %1049 = vadd.xlane.f32.xlu0 %v1048
    %v1050 = vpop.xlane.xlu0 %1049
    %v1051 = vsel %vm386, %v1007, 0.0
    %1052 = vadd.xlane.f32.xlu0 %v1051
    %v1053 = vpop.xlane.xlu0 %1052
    %v1054 = vsel %vm386, %v1008, 0.0
    %1055 = vadd.xlane.f32.xlu0 %v1054
    %v1056 = vpop.xlane.xlu0 %1055
    %v1073 = vlaneseq
    %v1074 = vshrl.u32 %v1073, 7
    %v1075 = vsub.s32 %v220, %v1074
    %v1076 = vrot.slane %v1011, %v1075
    %v1077 = vadd.s32 %v220, 4294967288
    %v1078 = vlaneseq
    %v1079 = vshrl.u32 %v1078, 7
    %v1080 = vsub.s32 %v1077, %v1079
    %v1081 = vrot.slane %v1014, %v1080
    %vm1082 = vcmask 130112
    %v1083 = vsel %vm1082, %v1081, %v1076
    %v1084 = vlaneseq
    %v1085 = vshrl.u32 %v1084, 7
    %v1086 = vsub.s32 %v220, %v1085
    %v1087 = vrot.slane %v1017, %v1086
    %v1088 = vlaneseq
    %v1089 = vshrl.u32 %v1088, 7
    %v1090 = vsub.s32 %v1077, %v1089
    %v1091 = vrot.slane %v1020, %v1090
    %v1092 = vsel %vm1082, %v1091, %v1087
    %v1093 = vlaneseq
    %v1094 = vshrl.u32 %v1093, 7
    %v1095 = vsub.s32 %v220, %v1094
    %v1096 = vrot.slane %v1023, %v1095
    %v1097 = vlaneseq
    %v1098 = vshrl.u32 %v1097, 7
    %v1099 = vsub.s32 %v1077, %v1098
    %v1100 = vrot.slane %v1026, %v1099
    %v1101 = vsel %vm1082, %v1100, %v1096
    %v1102 = vlaneseq
    %v1103 = vshrl.u32 %v1102, 7
    %v1104 = vsub.s32 %v220, %v1103
    %v1105 = vrot.slane %v1029, %v1104
    %v1106 = vlaneseq
    %v1107 = vshrl.u32 %v1106, 7
    %v1108 = vsub.s32 %v1077, %v1107
    %v1109 = vrot.slane %v1032, %v1108
    %v1110 = vsel %vm1082, %v1109, %v1105
    %v1111 = vlaneseq
    %v1112 = vshrl.u32 %v1111, 7
    %v1113 = vsub.s32 %v220, %v1112
    %v1114 = vrot.slane %v1035, %v1113
    %v1115 = vlaneseq
    %v1116 = vshrl.u32 %v1115, 7
    %v1117 = vsub.s32 %v1077, %v1116
    %v1118 = vrot.slane %v1038, %v1117
    %v1119 = vsel %vm1082, %v1118, %v1114
    %v1120 = vlaneseq
    %v1121 = vshrl.u32 %v1120, 7
    %v1122 = vsub.s32 %v220, %v1121
    %v1123 = vrot.slane %v1041, %v1122
    %v1124 = vlaneseq
    %v1125 = vshrl.u32 %v1124, 7
    %v1126 = vsub.s32 %v1077, %v1125
    %v1127 = vrot.slane %v1044, %v1126
    %v1128 = vsel %vm1082, %v1127, %v1123
    %v1129 = vlaneseq
    %v1130 = vshrl.u32 %v1129, 7
    %v1131 = vsub.s32 %v220, %v1130
    %v1132 = vrot.slane %v1047, %v1131
    %v1133 = vlaneseq
    %v1134 = vshrl.u32 %v1133, 7
    %v1135 = vsub.s32 %v1077, %v1134
    %v1136 = vrot.slane %v1050, %v1135
    %v1137 = vsel %vm1082, %v1136, %v1132
    %v1138 = vlaneseq
    %v1139 = vshrl.u32 %v1138, 7
    %v1140 = vsub.s32 %v220, %v1139
    %v1141 = vrot.slane %v1053, %v1140
    %v1142 = vlaneseq
    %v1143 = vshrl.u32 %v1142, 7
    %v1144 = vsub.s32 %v1077, %v1143
    %v1145 = vrot.slane %v1056, %v1144
    %v1146 = vsel %vm1082, %v1145, %v1141
    %vm1147 = vcmask 1041409
    %v1148 = vsel %vm1147, %v1092, %v1083
    %vm1149 = vcmask 1042434
    %v1150 = vsel %vm1149, %v1101, %v1148
    %vm1151 = vcmask 1043459
    %v1152 = vsel %vm1151, %v1110, %v1150
    %vm1153 = vcmask 1044484
    %v1154 = vsel %vm1153, %v1119, %v1152
    %vm1155 = vcmask 1045509
    %v1156 = vsel %vm1155, %v1128, %v1154
    %vm1157 = vcmask 1046534
    %v1158 = vsel %vm1157, %v1137, %v1156
    %vm1159 = vcmask 1047559
    %v1160 = vsel %vm1159, %v1146, %v1158
    %vm1162 = vcmask 130048
    %v1163 = vsel %vm1162, %v1160, -inf
    %1164 = vmax.xlane.f32.xlu0 %v1163
    %v1165 = vpop.xlane.xlu0 %1164
    %v1167 = vlaneseq
    %v1168 = vshrl.u32 %v1167, 7
    %v1169 = vsub.s32 0, %v1168
    %v1170 = vrot.slane %v1165, %v1169
    %v1171 = vlaneseq
    %v1172 = vshrl.u32 %v1171, 7
    %v1173 = vsub.s32 1, %v1172
    %v1174 = vrot.slane %v1165, %v1173
    %v1175 = vlaneseq
    %v1176 = vshrl.u32 %v1175, 7
    %v1177 = vsub.s32 2, %v1176
    %v1178 = vrot.slane %v1165, %v1177
    %v1179 = vlaneseq
    %v1180 = vshrl.u32 %v1179, 7
    %v1181 = vsub.s32 3, %v1180
    %v1182 = vrot.slane %v1165, %v1181
    %v1183 = vlaneseq
    %v1184 = vshrl.u32 %v1183, 7
    %v1185 = vsub.s32 4, %v1184
    %v1186 = vrot.slane %v1165, %v1185
    %v1187 = vlaneseq
    %v1188 = vshrl.u32 %v1187, 7
    %v1189 = vsub.s32 5, %v1188
    %v1190 = vrot.slane %v1165, %v1189
    %v1191 = vlaneseq
    %v1192 = vshrl.u32 %v1191, 7
    %v1193 = vsub.s32 6, %v1192
    %v1194 = vrot.slane %v1165, %v1193
    %v1195 = vlaneseq
    %v1196 = vshrl.u32 %v1195, 7
    %v1197 = vsub.s32 7, %v1196
    %v1198 = vrot.slane %v1165, %v1197
    %v1207 = vsub.f32 %v1011, %v1170
    %v1208 = vsub.f32 %v1014, %v1170
    %v1209 = vsub.f32 %v1017, %v1174
    %v1210 = vsub.f32 %v1020, %v1174
    %v1211 = vsub.f32 %v1023, %v1178
    %v1212 = vsub.f32 %v1026, %v1178
    %v1213 = vsub.f32 %v1029, %v1182
    %v1214 = vsub.f32 %v1032, %v1182
    %v1215 = vsub.f32 %v1035, %v1186
    %v1216 = vsub.f32 %v1038, %v1186
    %v1217 = vsub.f32 %v1041, %v1190
    %v1218 = vsub.f32 %v1044, %v1190
    %v1219 = vsub.f32 %v1047, %v1194
    %v1220 = vsub.f32 %v1050, %v1194
    %v1221 = vsub.f32 %v1053, %v1198
    %v1222 = vsub.f32 %v1056, %v1198
    %v1223 = vmul.f32 %v1207, 1.442695
    %v1224 = vpow.pop %v1223
    %v1225 = vmul.f32 %v1208, 1.442695
    %v1226 = vpow.pop %v1225
    %v1227 = vmul.f32 %v1209, 1.442695
    %v1228 = vpow.pop %v1227
    %v1229 = vmul.f32 %v1210, 1.442695
    %v1230 = vpow.pop %v1229
    %v1231 = vmul.f32 %v1211, 1.442695
    %v1232 = vpow.pop %v1231
    %v1233 = vmul.f32 %v1212, 1.442695
    %v1234 = vpow.pop %v1233
    %v1235 = vmul.f32 %v1213, 1.442695
    %v1236 = vpow.pop %v1235
    %v1237 = vmul.f32 %v1214, 1.442695
    %v1238 = vpow.pop %v1237
    %v1239 = vmul.f32 %v1215, 1.442695
    %v1240 = vpow.pop %v1239
    %v1241 = vmul.f32 %v1216, 1.442695
    %v1242 = vpow.pop %v1241
    %v1243 = vmul.f32 %v1217, 1.442695
    %v1244 = vpow.pop %v1243
    %v1245 = vmul.f32 %v1218, 1.442695
    %v1246 = vpow.pop %v1245
    %v1247 = vmul.f32 %v1219, 1.442695
    %v1248 = vpow.pop %v1247
    %v1249 = vmul.f32 %v1220, 1.442695
    %v1250 = vpow.pop %v1249
    %v1251 = vmul.f32 %v1221, 1.442695
    %v1252 = vpow.pop %v1251
    %v1253 = vmul.f32 %v1222, 1.442695
    %v1254 = vpow.pop %v1253
    %1271 = vset.pattern.permute.xlu0 0
    %1272 = vperm.xlu0 %1271, %v1224
    %v1273 = vpop.permute.xlu0 %1272
    %1274 = vset.pattern.permute.xlu0 0
    %1275 = vperm.xlu0 %1274, %v1226
    %v1276 = vpop.permute.xlu0 %1275
    %1277 = vset.pattern.permute.xlu0 0
    %1278 = vperm.xlu0 %1277, %v1228
    %v1279 = vpop.permute.xlu0 %1278
    %1280 = vset.pattern.permute.xlu0 0
    %1281 = vperm.xlu0 %1280, %v1230
    %v1282 = vpop.permute.xlu0 %1281
    %1283 = vset.pattern.permute.xlu0 0
    %1284 = vperm.xlu0 %1283, %v1232
    %v1285 = vpop.permute.xlu0 %1284
    %1286 = vset.pattern.permute.xlu0 0
    %1287 = vperm.xlu0 %1286, %v1234
    %v1288 = vpop.permute.xlu0 %1287
    %1289 = vset.pattern.permute.xlu0 0
    %1290 = vperm.xlu0 %1289, %v1236
    %v1291 = vpop.permute.xlu0 %1290
    %1292 = vset.pattern.permute.xlu0 0
    %1293 = vperm.xlu0 %1292, %v1238
    %v1294 = vpop.permute.xlu0 %1293
    %1295 = vset.pattern.permute.xlu0 0
    %1296 = vperm.xlu0 %1295, %v1240
    %v1297 = vpop.permute.xlu0 %1296
    %1298 = vset.pattern.permute.xlu0 0
    %1299 = vperm.xlu0 %1298, %v1242
    %v1300 = vpop.permute.xlu0 %1299
    %1301 = vset.pattern.permute.xlu0 0
    %1302 = vperm.xlu0 %1301, %v1244
    %v1303 = vpop.permute.xlu0 %1302
    %1304 = vset.pattern.permute.xlu0 0
    %1305 = vperm.xlu0 %1304, %v1246
    %v1306 = vpop.permute.xlu0 %1305
    %1307 = vset.pattern.permute.xlu0 0
    %1308 = vperm.xlu0 %1307, %v1248
    %v1309 = vpop.permute.xlu0 %1308
    %1310 = vset.pattern.permute.xlu0 0
    %1311 = vperm.xlu0 %1310, %v1250
    %v1312 = vpop.permute.xlu0 %1311
    %1313 = vset.pattern.permute.xlu0 0
    %1314 = vperm.xlu0 %1313, %v1252
    %v1315 = vpop.permute.xlu0 %1314
    %1316 = vset.pattern.permute.xlu0 0
    %1317 = vperm.xlu0 %1316, %v1254
    %v1318 = vpop.permute.xlu0 %1317
    %v1319 = vlaneseq
    %v1320 = vshrl.u32 %v1319, 7
    %v1321 = vsub.s32 %v220, %v1320
    %v1322 = vrot.slane %v1273, %v1321
    %v1323 = vlaneseq
    %v1324 = vshrl.u32 %v1323, 7
    %v1325 = vsub.s32 %v1077, %v1324
    %v1326 = vrot.slane %v1276, %v1325
    %v1327 = vsel %vm1082, %v1326, %v1322
    %v1328 = vlaneseq
    %v1329 = vshrl.u32 %v1328, 7
    %v1330 = vsub.s32 %v220, %v1329
    %v1331 = vrot.slane %v1279, %v1330
    %v1332 = vlaneseq
    %v1333 = vshrl.u32 %v1332, 7
    %v1334 = vsub.s32 %v1077, %v1333
    %v1335 = vrot.slane %v1282, %v1334
    %v1336 = vsel %vm1082, %v1335, %v1331
    %v1337 = vlaneseq
    %v1338 = vshrl.u32 %v1337, 7
    %v1339 = vsub.s32 %v220, %v1338
    %v1340 = vrot.slane %v1285, %v1339
    %v1341 = vlaneseq
    %v1342 = vshrl.u32 %v1341, 7
    %v1343 = vsub.s32 %v1077, %v1342
    %v1344 = vrot.slane %v1288, %v1343
    %v1345 = vsel %vm1082, %v1344, %v1340
    %v1346 = vlaneseq
    %v1347 = vshrl.u32 %v1346, 7
    %v1348 = vsub.s32 %v220, %v1347
    %v1349 = vrot.slane %v1291, %v1348
    %v1350 = vlaneseq
    %v1351 = vshrl.u32 %v1350, 7
    %v1352 = vsub.s32 %v1077, %v1351
    %v1353 = vrot.slane %v1294, %v1352
    %v1354 = vsel %vm1082, %v1353, %v1349
    %v1355 = vlaneseq
    %v1356 = vshrl.u32 %v1355, 7
    %v1357 = vsub.s32 %v220, %v1356
    %v1358 = vrot.slane %v1297, %v1357
    %v1359 = vlaneseq
    %v1360 = vshrl.u32 %v1359, 7
    %v1361 = vsub.s32 %v1077, %v1360
    %v1362 = vrot.slane %v1300, %v1361
    %v1363 = vsel %vm1082, %v1362, %v1358
    %v1364 = vlaneseq
    %v1365 = vshrl.u32 %v1364, 7
    %v1366 = vsub.s32 %v220, %v1365
    %v1367 = vrot.slane %v1303, %v1366
    %v1368 = vlaneseq
    %v1369 = vshrl.u32 %v1368, 7
    %v1370 = vsub.s32 %v1077, %v1369
    %v1371 = vrot.slane %v1306, %v1370
    %v1372 = vsel %vm1082, %v1371, %v1367
    %v1373 = vlaneseq
    %v1374 = vshrl.u32 %v1373, 7
    %v1375 = vsub.s32 %v220, %v1374
    %v1376 = vrot.slane %v1309, %v1375
    %v1377 = vlaneseq
    %v1378 = vshrl.u32 %v1377, 7
    %v1379 = vsub.s32 %v1077, %v1378
    %v1380 = vrot.slane %v1312, %v1379
    %v1381 = vsel %vm1082, %v1380, %v1376
    %v1382 = vlaneseq
    %v1383 = vshrl.u32 %v1382, 7
    %v1384 = vsub.s32 %v220, %v1383
    %v1385 = vrot.slane %v1315, %v1384
    %v1386 = vlaneseq
    %v1387 = vshrl.u32 %v1386, 7
    %v1388 = vsub.s32 %v1077, %v1387
    %v1389 = vrot.slane %v1318, %v1388
    %v1390 = vsel %vm1082, %v1389, %v1385
    %v1391 = vsel %vm1147, %v1336, %v1327
    %v1392 = vsel %vm1149, %v1345, %v1391
    %v1393 = vsel %vm1151, %v1354, %v1392
    %v1394 = vsel %vm1153, %v1363, %v1393
    %v1395 = vsel %vm1155, %v1372, %v1394
    %v1396 = vsel %vm1157, %v1381, %v1395
    %v1397 = vsel %vm1159, %v1390, %v1396
    %v1399 = vsel %vm1162, %v1397, 0.0
    %1400 = vadd.xlane.f32.xlu0 %v1399
    %v1401 = vpop.xlane.xlu0 %1400
    %v1402 = vrcp.pop %v1401
    %v1404 = vlaneseq
    %v1405 = vshrl.u32 %v1404, 7
    %v1406 = vsub.s32 0, %v1405
    %v1407 = vrot.slane %v1402, %v1406
    %v1408 = vlaneseq
    %v1409 = vshrl.u32 %v1408, 7
    %v1410 = vsub.s32 1, %v1409
    %v1411 = vrot.slane %v1402, %v1410
    %v1412 = vlaneseq
    %v1413 = vshrl.u32 %v1412, 7
    %v1414 = vsub.s32 2, %v1413
    %v1415 = vrot.slane %v1402, %v1414
    %v1416 = vlaneseq
    %v1417 = vshrl.u32 %v1416, 7
    %v1418 = vsub.s32 3, %v1417
    %v1419 = vrot.slane %v1402, %v1418
    %v1420 = vlaneseq
    %v1421 = vshrl.u32 %v1420, 7
    %v1422 = vsub.s32 4, %v1421
    %v1423 = vrot.slane %v1402, %v1422
    %v1424 = vlaneseq
    %v1425 = vshrl.u32 %v1424, 7
    %v1426 = vsub.s32 5, %v1425
    %v1427 = vrot.slane %v1402, %v1426
    %v1428 = vlaneseq
    %v1429 = vshrl.u32 %v1428, 7
    %v1430 = vsub.s32 6, %v1429
    %v1431 = vrot.slane %v1402, %v1430
    %v1432 = vlaneseq
    %v1433 = vshrl.u32 %v1432, 7
    %v1434 = vsub.s32 7, %v1433
    %v1435 = vrot.slane %v1402, %v1434
    %v1444 = vmul.f32 %v1224, %v1407
    %v1445 = vmul.f32 %v1226, %v1407
    %v1446 = vmul.f32 %v1228, %v1411
    %v1447 = vmul.f32 %v1230, %v1411
    %v1448 = vmul.f32 %v1232, %v1415
    %v1449 = vmul.f32 %v1234, %v1415
    %v1450 = vmul.f32 %v1236, %v1419
    %v1451 = vmul.f32 %v1238, %v1419
    %v1452 = vmul.f32 %v1240, %v1423
    %v1453 = vmul.f32 %v1242, %v1423
    %v1454 = vmul.f32 %v1244, %v1427
    %v1455 = vmul.f32 %v1246, %v1427
    %v1456 = vmul.f32 %v1248, %v1431
    %v1457 = vmul.f32 %v1250, %v1431
    %v1458 = vmul.f32 %v1252, %v1435
    %v1459 = vmul.f32 %v1254, %v1435
    %1461 = vset.pattern.permute.xlu0 0
    %1462 = vperm.xlu0 %1461, %v1444
    %v1463 = vpop.permute.xlu0 %1462
    %1466 = vset.pattern.permute.xlu0 0
    %1467 = vperm.xlu0 %1466, %v1445
    %v1468 = vpop.permute.xlu0 %1467
    %1471 = vset.pattern.permute.xlu0 0
    %1472 = vperm.xlu0 %1471, %v1446
    %v1473 = vpop.permute.xlu0 %1472
    %1476 = vset.pattern.permute.xlu0 0
    %1477 = vperm.xlu0 %1476, %v1447
    %v1478 = vpop.permute.xlu0 %1477
    %1481 = vset.pattern.permute.xlu0 0
    %1482 = vperm.xlu0 %1481, %v1448
    %v1483 = vpop.permute.xlu0 %1482
    %1486 = vset.pattern.permute.xlu0 0
    %1487 = vperm.xlu0 %1486, %v1449
    %v1488 = vpop.permute.xlu0 %1487
    %1491 = vset.pattern.permute.xlu0 0
    %1492 = vperm.xlu0 %1491, %v1450
    %v1493 = vpop.permute.xlu0 %1492
    %1496 = vset.pattern.permute.xlu0 0
    %1497 = vperm.xlu0 %1496, %v1451
    %v1498 = vpop.permute.xlu0 %1497
    %1501 = vset.pattern.permute.xlu0 0
    %1502 = vperm.xlu0 %1501, %v1452
    %v1503 = vpop.permute.xlu0 %1502
    %1506 = vset.pattern.permute.xlu0 0
    %1507 = vperm.xlu0 %1506, %v1453
    %v1508 = vpop.permute.xlu0 %1507
    %1511 = vset.pattern.permute.xlu0 0
    %1512 = vperm.xlu0 %1511, %v1454
    %v1513 = vpop.permute.xlu0 %1512
    %1516 = vset.pattern.permute.xlu0 0
    %1517 = vperm.xlu0 %1516, %v1455
    %v1518 = vpop.permute.xlu0 %1517
    %1521 = vset.pattern.permute.xlu0 0
    %1522 = vperm.xlu0 %1521, %v1456
    %v1523 = vpop.permute.xlu0 %1522
    %1526 = vset.pattern.permute.xlu0 0
    %1527 = vperm.xlu0 %1526, %v1457
    %v1528 = vpop.permute.xlu0 %1527
    %1531 = vset.pattern.permute.xlu0 0
    %1532 = vperm.xlu0 %1531, %v1458
    %v1533 = vpop.permute.xlu0 %1532
    %1536 = vset.pattern.permute.xlu0 0
    %1537 = vperm.xlu0 %1536, %v1459
    %v1538 = vpop.permute.xlu0 %1537
    %v1540 = vmul.f32 %v1463, %v203
    %v1541 = vmul.f32 %v1468, %v204
    %v1542 = vmul.f32 %v1473, %v205
    %v1543 = vmul.f32 %v1478, %v206
    %v1544 = vmul.f32 %v1483, %v207
    %v1545 = vmul.f32 %v1488, %v208
    %v1546 = vmul.f32 %v1493, %v209
    %v1547 = vmul.f32 %v1498, %v210
    %v1548 = vmul.f32 %v1503, %v211
    %v1549 = vmul.f32 %v1508, %v212
    %v1550 = vmul.f32 %v1513, %v213
    %v1551 = vmul.f32 %v1518, %v214
    %v1552 = vmul.f32 %v1523, %v215
    %v1553 = vmul.f32 %v1528, %v216
    %v1554 = vmul.f32 %v1533, %v217
    %v1555 = vmul.f32 %v1538, %v218
    %v1556 = vsel %vm386, %v1540, 0.0
    %v1557 = vsel %vm386, %v1541, 0.0
    %v1558 = vadd.f32 %v1556, %v1557
    %v1559 = vrot.slane %v1558, 4
    %v1560 = vadd.f32 %v1558, %v1559
    %v1561 = vrot.slane %v1560, 2
    %v1562 = vadd.f32 %v1560, %v1561
    %v1563 = vrot.slane %v1562, 1
    %v1564 = vadd.f32 %v1562, %v1563
    %v1565 = vsel %vm386, %v1542, 0.0
    %v1566 = vsel %vm386, %v1543, 0.0
    %v1567 = vadd.f32 %v1565, %v1566
    %v1568 = vrot.slane %v1567, 4
    %v1569 = vadd.f32 %v1567, %v1568
    %v1570 = vrot.slane %v1569, 2
    %v1571 = vadd.f32 %v1569, %v1570
    %v1572 = vrot.slane %v1571, 1
    %v1573 = vadd.f32 %v1571, %v1572
    %v1574 = vsel %vm386, %v1544, 0.0
    %v1575 = vsel %vm386, %v1545, 0.0
    %v1576 = vadd.f32 %v1574, %v1575
    %v1577 = vrot.slane %v1576, 4
    %v1578 = vadd.f32 %v1576, %v1577
    %v1579 = vrot.slane %v1578, 2
    %v1580 = vadd.f32 %v1578, %v1579
    %v1581 = vrot.slane %v1580, 1
    %v1582 = vadd.f32 %v1580, %v1581
    %v1583 = vsel %vm386, %v1546, 0.0
    %v1584 = vsel %vm386, %v1547, 0.0
    %v1585 = vadd.f32 %v1583, %v1584
    %v1586 = vrot.slane %v1585, 4
    %v1587 = vadd.f32 %v1585, %v1586
    %v1588 = vrot.slane %v1587, 2
    %v1589 = vadd.f32 %v1587, %v1588
    %v1590 = vrot.slane %v1589, 1
    %v1591 = vadd.f32 %v1589, %v1590
    %v1592 = vsel %vm386, %v1548, 0.0
    %v1593 = vsel %vm386, %v1549, 0.0
    %v1594 = vadd.f32 %v1592, %v1593
    %v1595 = vrot.slane %v1594, 4
    %v1596 = vadd.f32 %v1594, %v1595
    %v1597 = vrot.slane %v1596, 2
    %v1598 = vadd.f32 %v1596, %v1597
    %v1599 = vrot.slane %v1598, 1
    %v1600 = vadd.f32 %v1598, %v1599
    %v1601 = vsel %vm386, %v1550, 0.0
    %v1602 = vsel %vm386, %v1551, 0.0
    %v1603 = vadd.f32 %v1601, %v1602
    %v1604 = vrot.slane %v1603, 4
    %v1605 = vadd.f32 %v1603, %v1604
    %v1606 = vrot.slane %v1605, 2
    %v1607 = vadd.f32 %v1605, %v1606
    %v1608 = vrot.slane %v1607, 1
    %v1609 = vadd.f32 %v1607, %v1608
    %v1610 = vsel %vm386, %v1552, 0.0
    %v1611 = vsel %vm386, %v1553, 0.0
    %v1612 = vadd.f32 %v1610, %v1611
    %v1613 = vrot.slane %v1612, 4
    %v1614 = vadd.f32 %v1612, %v1613
    %v1615 = vrot.slane %v1614, 2
    %v1616 = vadd.f32 %v1614, %v1615
    %v1617 = vrot.slane %v1616, 1
    %v1618 = vadd.f32 %v1616, %v1617
    %v1619 = vsel %vm386, %v1554, 0.0
    %v1620 = vsel %vm386, %v1555, 0.0
    %v1621 = vadd.f32 %v1619, %v1620
    %v1622 = vrot.slane %v1621, 4
    %v1623 = vadd.f32 %v1621, %v1622
    %v1624 = vrot.slane %v1623, 2
    %v1625 = vadd.f32 %v1623, %v1624
    %v1626 = vrot.slane %v1625, 1
    %v1627 = vadd.f32 %v1625, %v1626
    %v1636 = vsel %vm1147, %v1573, %v1564
    %v1637 = vsel %vm1149, %v1582, %v1636
    %v1638 = vsel %vm1151, %v1591, %v1637
    %v1639 = vsel %vm1153, %v1600, %v1638
    %v1640 = vsel %vm1155, %v1609, %v1639
    %v1641 = vsel %vm1157, %v1618, %v1640
    %v1642 = vsel %vm1159, %v1627, %v1641
    %v1643 = vsel %vm386, %v1642, 0
    %1645 = vmatprep.subr.mxu0 0.0
    %1646 = vmatpush1.msra.mxu0 %v107
    %1647 = vmatprep.subr.mxu0 0.0
    %1648 = vmatpush1.msra.mxu0 %v108
    %1649 = vmatprep.subr.mxu0 0.0
    %1650 = vmatpush1.msra.mxu0 %v109
    %1651 = vmatprep.subr.mxu0 0.0
    %1652 = vmatpush1.msra.mxu0 %v110
    %1653 = vmatprep.subr.mxu0 0.0
    %1654 = vmatpush1.msra.mxu0 0.0
    %1655 = vmatprep.subr.mxu0 0.0
    %1656 = vmatpush1.msra.mxu0 0.0
    %1657 = vmatprep.subr.mxu0 0.0
    %1658 = vmatpush1.msra.mxu0 0.0
    %1659 = vmatprep.subr.mxu0 0.0
    %1660 = vmatpush1.msra.mxu0 0.0
    %1661 = vmatprep.subr.mxu0 0.0
    %1662 = vmatpush1.msra.mxu0 0.0
    %1663 = vmatprep.subr.mxu0 0.0
    %1664 = vmatpush1.msra.mxu0 0.0
    %1665 = vmatprep.subr.mxu0 0.0
    %1666 = vmatpush1.msra.mxu0 0.0
    %1667 = vmatprep.subr.mxu0 0.0
    %1668 = vmatpush1.msra.mxu0 0.0
    %1669 = vmatprep.subr.mxu0 0.0
    %1670 = vmatpush1.msra.mxu0 0.0
    %1671 = vmatprep.subr.mxu0 0.0
    %1672 = vmatpush1.msra.mxu0 0.0
    %1673 = vmatprep.subr.mxu0 0.0
    %1674 = vmatpush1.msra.mxu0 0.0
    %1675 = vmatprep.subr.mxu0 0.0
    %1676 = vmatpush1.msra.mxu0 0.0
    %1677 = vmatprep.subr.mxu0 0.0
    %1678 = vmatpush1.msra.mxu0 0.0
    %1679 = vmatprep.subr.mxu0 0.0
    %1680 = vmatpush1.msra.mxu0 0.0
    %1681 = vmatprep.subr.mxu0 0.0
    %1682 = vmatpush1.msra.mxu0 0.0
    %1683 = vmatprep.subr.mxu0 0.0
    %1684 = vmatpush1.msra.mxu0 0.0
    %1685 = vmatprep.subr.mxu0 0.0
    %1686 = vmatpush1.msra.mxu0 0.0
    %1687 = vmatprep.subr.mxu0 0.0
    %1688 = vmatpush1.msra.mxu0 0.0
    %1689 = vmatprep.subr.mxu0 0.0
    %1690 = vmatpush1.msra.mxu0 0.0
    %1691 = vmatprep.subr.mxu0 0.0
    %1692 = vmatpush1.msra.mxu0 0.0
    %1693 = vmatprep.subr.mxu0 0.0
    %1694 = vmatpush1.msra.mxu0 0.0
    %1695 = vmatprep.subr.mxu0 0.0
    %1696 = vmatpush1.msra.mxu0 0.0
    %1697 = vmatprep.subr.mxu0 0.0
    %1698 = vmatpush1.msra.mxu0 0.0
    %1699 = vmatprep.subr.mxu0 0.0
    %1700 = vmatpush1.msra.mxu0 0.0
    %1701 = vmatprep.subr.mxu0 0.0
    %1702 = vmatpush1.msra.mxu0 0.0
    %1703 = vmatprep.subr.mxu0 0.0
    %1704 = vmatpush1.msra.mxu0 0.0
    %1705 = vmatprep.subr.mxu0 0.0
    %1706 = vmatpush1.msra.mxu0 0.0
    %1707 = vmatprep.subr.mxu0 0.0
    %1708 = vmatpush1.msra.mxu0 0.0
    %1709 = vmatprep.mubr.f32.mxu0 0.0
    %1710 = vmatmul.mubr.f32.gmra.mrb[0].mxu0 %v1643
    %v1711 = vpop.f32.mrb[0].mxu0
    %v1712 = vadd.f32 %v805, %v1711
    %v1713 = vpop.f32.mrb[0].mxu0
    %1714 = vdwg.mxu0
    %v1715 = vlaneseq
    %v1716 = vshrl.u32 %v1715, 7
    %v1717 = vsub.s32 4, %v1716
    %v1718 = vrot.slane %v132, %v1717
    %v1719 = vadd.f32 %v1712, %v1718
    %vm1720 = vcmp.gt.f32.partialorder %v1719, 0.0
    %v1721 = vmul.f32 %v1719, 1.442695
    %v1722 = vpow.pop %v1721
    %v1723 = vsub.f32 %v1722, 1.0
    %v1724 = vmul.f32 %v1723, 1.6732632
    %v1725 = vsel %vm1720, %v1719, %v1724
    %v1726 = vmul.f32 %v1725, 1.050701
    %v1727 = vlaneseq
    %v1728 = vshrl.u32 %v1727, 7
    %v1729 = vsub.s32 5, %v1728
    %v1730 = vrot.slane %v132, %v1729
    %v1732 = vsel %vm386, %v1726, 0
    %1734 = vmatprep.subr.mxu0 0.0
    %1735 = vmatpush1.msra.mxu0 %v115
    %1736 = vmatprep.subr.mxu0 0.0
    %1737 = vmatpush1.msra.mxu0 %v116
    %1738 = vmatprep.subr.mxu0 0.0
    %1739 = vmatpush1.msra.mxu0 %v117
    %1740 = vmatprep.subr.mxu0 0.0
    %1741 = vmatpush1.msra.mxu0 %v118
    %1742 = vmatprep.subr.mxu0 0.0
    %1743 = vmatpush1.msra.mxu0 0.0
    %1744 = vmatprep.subr.mxu0 0.0
    %1745 = vmatpush1.msra.mxu0 0.0
    %1746 = vmatprep.subr.mxu0 0.0
    %1747 = vmatpush1.msra.mxu0 0.0
    %1748 = vmatprep.subr.mxu0 0.0
    %1749 = vmatpush1.msra.mxu0 0.0
    %1750 = vmatprep.subr.mxu0 0.0
    %1751 = vmatpush1.msra.mxu0 0.0
    %1752 = vmatprep.subr.mxu0 0.0
    %1753 = vmatpush1.msra.mxu0 0.0
    %1754 = vmatprep.subr.mxu0 0.0
    %1755 = vmatpush1.msra.mxu0 0.0
    %1756 = vmatprep.subr.mxu0 0.0
    %1757 = vmatpush1.msra.mxu0 0.0
    %1758 = vmatprep.subr.mxu0 0.0
    %1759 = vmatpush1.msra.mxu0 0.0
    %1760 = vmatprep.subr.mxu0 0.0
    %1761 = vmatpush1.msra.mxu0 0.0
    %1762 = vmatprep.subr.mxu0 0.0
    %1763 = vmatpush1.msra.mxu0 0.0
    %1764 = vmatprep.subr.mxu0 0.0
    %1765 = vmatpush1.msra.mxu0 0.0
    %1766 = vmatprep.subr.mxu0 0.0
    %1767 = vmatpush1.msra.mxu0 0.0
    %1768 = vmatprep.subr.mxu0 0.0
    %1769 = vmatpush1.msra.mxu0 0.0
    %1770 = vmatprep.subr.mxu0 0.0
    %1771 = vmatpush1.msra.mxu0 0.0
    %1772 = vmatprep.subr.mxu0 0.0
    %1773 = vmatpush1.msra.mxu0 0.0
    %1774 = vmatprep.subr.mxu0 0.0
    %1775 = vmatpush1.msra.mxu0 0.0
    %1776 = vmatprep.subr.mxu0 0.0
    %1777 = vmatpush1.msra.mxu0 0.0
    %1778 = vmatprep.subr.mxu0 0.0
    %1779 = vmatpush1.msra.mxu0 0.0
    %1780 = vmatprep.subr.mxu0 0.0
    %1781 = vmatpush1.msra.mxu0 0.0
    %1782 = vmatprep.subr.mxu0 0.0
    %1783 = vmatpush1.msra.mxu0 0.0
    %1784 = vmatprep.subr.mxu0 0.0
    %1785 = vmatpush1.msra.mxu0 0.0
    %1786 = vmatprep.subr.mxu0 0.0
    %1787 = vmatpush1.msra.mxu0 0.0
    %1788 = vmatprep.subr.mxu0 0.0
    %1789 = vmatpush1.msra.mxu0 0.0
    %1790 = vmatprep.subr.mxu0 0.0
    %1791 = vmatpush1.msra.mxu0 0.0
    %1792 = vmatprep.subr.mxu0 0.0
    %1793 = vmatpush1.msra.mxu0 0.0
    %1794 = vmatprep.subr.mxu0 0.0
    %1795 = vmatpush1.msra.mxu0 0.0
    %1796 = vmatprep.subr.mxu0 0.0
    %1797 = vmatpush1.msra.mxu0 0.0
    %1798 = vmatprep.mubr.f32.mxu0 0.0
    %1799 = vmatmul.mubr.f32.gmra.mrb[0].mxu0 %v1732
    %v1800 = vpop.f32.mrb[0].mxu0
    %v1801 = vadd.f32 %v1730, %v1800
    %v1802 = vpop.f32.mrb[0].mxu0
    %1803 = vdwg.mxu0
    %vm1804 = vcmp.gt.f32.partialorder %v1801, 0.0
    %v1805 = vmul.f32 %v1801, 1.442695
    %v1806 = vpow.pop %v1805
    %v1807 = vsub.f32 %v1806, 1.0
    %v1808 = vmul.f32 %v1807, 1.6732632
    %v1809 = vsel %vm1804, %v1801, %v1808
    %v1810 = vmul.f32 %v1809, 1.050701
    %v1811 = vlaneseq
    %v1812 = vshrl.u32 %v1811, 7
    %v1813 = vsub.s32 6, %v1812
    %v1814 = vrot.slane %v132, %v1813
    %v1815 = vlaneseq
    %v1816 = vshrl.u32 %v1815, 7
    %v1817 = vsub.s32 6, %v1816
    %v1818 = vrot.slane %v133, %v1817
    %v1820 = vsel %vm386, %v1810, 0
    %1822 = vmatprep.subr.mxu0 %v124
    %1823 = vmatpush1.msra.mxu0 %v123
    %1824 = vmatprep.subr.mxu0 %v126
    %1825 = vmatpush1.msra.mxu0 %v125
    %1826 = vmatprep.subr.mxu0 %v128
    %1827 = vmatpush1.msra.mxu0 %v127
    %1828 = vmatprep.subr.mxu0 %v130
    %1829 = vmatpush1.msra.mxu0 %v129
    %1830 = vmatprep.subr.mxu0 0.0
    %1831 = vmatpush1.msra.mxu0 0.0
    %1832 = vmatprep.subr.mxu0 0.0
    %1833 = vmatpush1.msra.mxu0 0.0
    %1834 = vmatprep.subr.mxu0 0.0
    %1835 = vmatpush1.msra.mxu0 0.0
    %1836 = vmatprep.subr.mxu0 0.0
    %1837 = vmatpush1.msra.mxu0 0.0
    %1838 = vmatprep.subr.mxu0 0.0
    %1839 = vmatpush1.msra.mxu0 0.0
    %1840 = vmatprep.subr.mxu0 0.0
    %1841 = vmatpush1.msra.mxu0 0.0
    %1842 = vmatprep.subr.mxu0 0.0
    %1843 = vmatpush1.msra.mxu0 0.0
    %1844 = vmatprep.subr.mxu0 0.0
    %1845 = vmatpush1.msra.mxu0 0.0
    %1846 = vmatprep.subr.mxu0 0.0
    %1847 = vmatpush1.msra.mxu0 0.0
    %1848 = vmatprep.subr.mxu0 0.0
    %1849 = vmatpush1.msra.mxu0 0.0
    %1850 = vmatprep.subr.mxu0 0.0
    %1851 = vmatpush1.msra.mxu0 0.0
    %1852 = vmatprep.subr.mxu0 0.0
    %1853 = vmatpush1.msra.mxu0 0.0
    %1854 = vmatprep.subr.mxu0 0.0
    %1855 = vmatpush1.msra.mxu0 0.0
    %1856 = vmatprep.subr.mxu0 0.0
    %1857 = vmatpush1.msra.mxu0 0.0
    %1858 = vmatprep.subr.mxu0 0.0
    %1859 = vmatpush1.msra.mxu0 0.0
    %1860 = vmatprep.subr.mxu0 0.0
    %1861 = vmatpush1.msra.mxu0 0.0
    %1862 = vmatprep.subr.mxu0 0.0
    %1863 = vmatpush1.msra.mxu0 0.0
    %1864 = vmatprep.subr.mxu0 0.0
    %1865 = vmatpush1.msra.mxu0 0.0
    %1866 = vmatprep.subr.mxu0 0.0
    %1867 = vmatpush1.msra.mxu0 0.0
    %1868 = vmatprep.subr.mxu0 0.0
    %1869 = vmatpush1.msra.mxu0 0.0
    %1870 = vmatprep.subr.mxu0 0.0
    %1871 = vmatpush1.msra.mxu0 0.0
    %1872 = vmatprep.subr.mxu0 0.0
    %1873 = vmatpush1.msra.mxu0 0.0
    %1874 = vmatprep.subr.mxu0 0.0
    %1875 = vmatpush1.msra.mxu0 0.0
    %1876 = vmatprep.subr.mxu0 0.0
    %1877 = vmatpush1.msra.mxu0 0.0
    %1878 = vmatprep.subr.mxu0 0.0
    %1879 = vmatpush1.msra.mxu0 0.0
    %1880 = vmatprep.subr.mxu0 0.0
    %1881 = vmatpush1.msra.mxu0 0.0
    %1882 = vmatprep.subr.mxu0 0.0
    %1883 = vmatpush1.msra.mxu0 0.0
    %1884 = vmatprep.subr.mxu0 0.0
    %1885 = vmatpush1.msra.mxu0 0.0
    %1886 = vmatprep.mubr.f32.mxu0 0.0
    %1887 = vmatmul.mubr.f32.gmra.mrb[0].mxu0 %v1820
    %v1888 = vpop.f32.mrb[0].mxu0
    %v1889 = vadd.f32 %v1814, %v1888
    %v1890 = vpop.f32.mrb[0].mxu0
    %v1891 = vadd.f32 %v1818, %v1890
    %1892 = vdwg.mxu0
    %1893 = vst [vmem:[#allocation5] sm:$0xff] %v1889
    %1894 = vst [vmem:[#allocation5 + $0x8] sm:$0xff] %v1891
    %1896 = vst.msk [vmem:[#allocation6] sm:$0xff] %vm386, %v733
    %1898 = vrot.lane.b32.xlu0 %v724, 96
    %v1899 = vpop.permute.xlu0 %1898
    %1901 = vst.msk [vmem:[#allocation8] sm:$0xff] %vm386, %v1899
    %v1902 = vlaneseq
    %v1903 = vshrl.u32 %v1902, 7
    %v1904 = vsub.s32 %v220, %v1903
    %v1905 = vrot.slane %v1463, %v1904
    %v1906 = vlaneseq
    %v1907 = vshrl.u32 %v1906, 7
    %v1908 = vsub.s32 %v1077, %v1907
    %v1909 = vrot.slane %v1468, %v1908
    %v1910 = vsel %vm1082, %v1909, %v1905
    %v1911 = vlaneseq
    %v1912 = vshrl.u32 %v1911, 7
    %v1913 = vsub.s32 %v220, %v1912
    %v1914 = vrot.slane %v1473, %v1913
    %v1915 = vlaneseq
    %v1916 = vshrl.u32 %v1915, 7
    %v1917 = vsub.s32 %v1077, %v1916
    %v1918 = vrot.slane %v1478, %v1917
    %v1919 = vsel %vm1082, %v1918, %v1914
    %v1920 = vlaneseq
    %v1921 = vshrl.u32 %v1920, 7
    %v1922 = vsub.s32 %v220, %v1921
    %v1923 = vrot.slane %v1483, %v1922
    %v1924 = vlaneseq
    %v1925 = vshrl.u32 %v1924, 7
    %v1926 = vsub.s32 %v1077, %v1925
    %v1927 = vrot.slane %v1488, %v1926
    %v1928 = vsel %vm1082, %v1927, %v1923
    %v1929 = vlaneseq
    %v1930 = vshrl.u32 %v1929, 7
    %v1931 = vsub.s32 %v220, %v1930
    %v1932 = vrot.slane %v1493, %v1931
    %v1933 = vlaneseq
    %v1934 = vshrl.u32 %v1933, 7
    %v1935 = vsub.s32 %v1077, %v1934
    %v1936 = vrot.slane %v1498, %v1935
    %v1937 = vsel %vm1082, %v1936, %v1932
    %v1938 = vlaneseq
    %v1939 = vshrl.u32 %v1938, 7
    %v1940 = vsub.s32 %v220, %v1939
    %v1941 = vrot.slane %v1503, %v1940
    %v1942 = vlaneseq
    %v1943 = vshrl.u32 %v1942, 7
    %v1944 = vsub.s32 %v1077, %v1943
    %v1945 = vrot.slane %v1508, %v1944
    %v1946 = vsel %vm1082, %v1945, %v1941
    %v1947 = vlaneseq
    %v1948 = vshrl.u32 %v1947, 7
    %v1949 = vsub.s32 %v220, %v1948
    %v1950 = vrot.slane %v1513, %v1949
    %v1951 = vlaneseq
    %v1952 = vshrl.u32 %v1951, 7
    %v1953 = vsub.s32 %v1077, %v1952
    %v1954 = vrot.slane %v1518, %v1953
    %v1955 = vsel %vm1082, %v1954, %v1950
    %v1956 = vlaneseq
    %v1957 = vshrl.u32 %v1956, 7
    %v1958 = vsub.s32 %v220, %v1957
    %v1959 = vrot.slane %v1523, %v1958
    %v1960 = vlaneseq
    %v1961 = vshrl.u32 %v1960, 7
    %v1962 = vsub.s32 %v1077, %v1961
    %v1963 = vrot.slane %v1528, %v1962
    %v1964 = vsel %vm1082, %v1963, %v1959
    %v1965 = vlaneseq
    %v1966 = vshrl.u32 %v1965, 7
    %v1967 = vsub.s32 %v220, %v1966
    %v1968 = vrot.slane %v1533, %v1967
    %v1969 = vlaneseq
    %v1970 = vshrl.u32 %v1969, 7
    %v1971 = vsub.s32 %v1077, %v1970
    %v1972 = vrot.slane %v1538, %v1971
    %v1973 = vsel %vm1082, %v1972, %v1968
    %v1974 = vsel %vm1147, %v1919, %v1910
    %v1975 = vsel %vm1149, %v1928, %v1974
    %v1976 = vsel %vm1151, %v1937, %v1975
    %v1977 = vsel %vm1153, %v1946, %v1976
    %v1978 = vsel %vm1155, %v1955, %v1977
    %v1979 = vsel %vm1157, %v1964, %v1978
    %v1980 = vsel %vm1159, %v1973, %v1979
    %1982 = vst.msk [vmem:[#allocation9] sm:$0xff] %vm1162, %v1980
    // Predicated region
    $region34: #{tpu_custom_call.1} parent=1 // pred_check
      _
    $region35: #{tpu_custom_call.1} parent=1 // pred_check_branch
      %1984 = sbr.rel (0) target = $region37
    $region36: #{tpu_custom_call.1} parent=1 // pred_region
      %s1986 = ssub.s32 256, 256
      %1987 = vsyncadd [#allocation4], %s1986
      %s1989 = sshll.u32 [#allocation5], 4
      %s1990 = int_to_ptr.vmem [resolvable:$true] %s1989
      %1992 = dma.vmem_to_hbm [thread:$0]  %s1990, 256, %s7, [#allocation4]
    $region37: #{tpu_custom_call.1} parent=1 // pred_fallthru
      _
    // Predicated region
    $region38: #{tpu_custom_call.1} parent=1 // pred_check
      _
    $region39: #{tpu_custom_call.1} parent=1 // pred_check_branch
      %1994 = sbr.rel (0) target = $region41
    $region40: #{tpu_custom_call.1} parent=1 // pred_region
      %s1996 = ssub.s32 128, 128
      %1997 = vsyncadd [#allocation7], %s1996
      %s1999 = sshll.u32 [#allocation6], 4
      %s2000 = int_to_ptr.vmem [resolvable:$true] %s1999
      %2002 = dma.vmem_to_hbm [thread:$0]  %s2000, 128, %s8, [#allocation7]
    $region41: #{tpu_custom_call.1} parent=1 // pred_fallthru
      _
    // Predicated region
    $region42: #{tpu_custom_call.1} parent=1 // pred_check
      _
    $region43: #{tpu_custom_call.1} parent=1 // pred_check_branch
      %2004 = sbr.rel (0) target = $region45
    $region44: #{tpu_custom_call.1} parent=1 // pred_region
      %s2006 = ssub.s32 128, 128
      %2007 = vsyncadd [#allocation7], %s2006
      %s2009 = sshll.u32 [#allocation8], 4
      %s2010 = int_to_ptr.vmem [resolvable:$true] %s2009
      %2012 = dma.vmem_to_hbm [thread:$0]  %s2010, 128, %s9, [#allocation7]
    $region45: #{tpu_custom_call.1} parent=1 // pred_fallthru
      _
    // Predicated region
    $region46: #{tpu_custom_call.1} parent=1 // pred_check
      _
    $region47: #{tpu_custom_call.1} parent=1 // pred_check_branch
      %2014 = sbr.rel (0) target = $region49
    $region48: #{tpu_custom_call.1} parent=1 // pred_region
      %s2016 = ssub.s32 128, 128
      %2017 = vsyncadd [#allocation10], %s2016
      %s2019 = sshll.u32 [#allocation9], 4
      %s2020 = int_to_ptr.vmem [resolvable:$true] %s2019
      %2022 = dma.vmem_to_hbm [thread:$0]  %s2020, 128, %s10, [#allocation10]
    $region49: #{tpu_custom_call.1} parent=1 // pred_fallthru
      _
    // Predicated region
    $region50: #{tpu_custom_call.1} parent=1 // pred_check
      _
    $region51: #{tpu_custom_call.1} parent=1 // pred_check_branch
      %2024 = sbr.rel (0) target = $region53
    $region52: #{tpu_custom_call.1} parent=1 // pred_region
      %2025 = dma.done [#allocation4], 256
    $region53: #{tpu_custom_call.1} parent=1 // pred_fallthru
      _
    // Predicated region
    $region54: #{tpu_custom_call.1} parent=1 // pred_check
      _
    $region55: #{tpu_custom_call.1} parent=1 // pred_check_branch
      %2027 = sbr.rel (0) target = $region57
    $region56: #{tpu_custom_call.1} parent=1 // pred_region
      %2028 = dma.done [#allocation7], 128
    $region57: #{tpu_custom_call.1} parent=1 // pred_fallthru
      _
    // Predicated region
    $region58: #{tpu_custom_call.1} parent=1 // pred_check
      _
    $region59: #{tpu_custom_call.1} parent=1 // pred_check_branch
      %2030 = sbr.rel (0) target = $region61
    $region60: #{tpu_custom_call.1} parent=1 // pred_region
      %2031 = dma.done [#allocation7], 128
    $region61: #{tpu_custom_call.1} parent=1 // pred_fallthru
      _
    // Predicated region
    $region62: #{tpu_custom_call.1} parent=1 // pred_check
      _
    $region63: #{tpu_custom_call.1} parent=1 // pred_check_branch
      %2033 = sbr.rel (0) target = $region65
    $region64: #{tpu_custom_call.1} parent=1 // pred_region
      %2034 = dma.done [#allocation10], 128
    $region65: #{tpu_custom_call.1} parent=1 // pred_fallthru
      _
    %2035 = vsyncpa [#allocation3], 1
    %2036 = vsyncpa [#allocation4], 1
    %2037 = vsyncpa [#allocation7], 1
    %2038 = vsyncpa [#allocation10], 1

</llo_original>
